<compile_context>
chip_gen: v7x
topology: tpu7x:2x2x1
jax: 0.10.0
libtpu: 0.0.40
codegen_flags: <defaults>
</compile_context>

<pallas_src>
import functools

import jax
import jax.numpy as jnp
from jax.experimental import pallas as pl
from jax.experimental.pallas import tpu as pltpu

LN_EPS = 1e-5  # PyTorch nn.LayerNorm default eps


def _layernorm_1pass(h, gamma, beta):
    # Single-pass stats: var = E[h^2] - mean^2.  f32 accumulation; any tiny
    # negative var from cancellation is covered by +eps before rsqrt.
    n = h.shape[-1]
    inv_n = 1.0 / n
    mean = jnp.sum(h, axis=-1, keepdims=True) * inv_n
    mean_sq = jnp.sum(h * h, axis=-1, keepdims=True) * inv_n
    var = mean_sq - mean * mean
    inv = jax.lax.rsqrt(var + LN_EPS)  # EUP slot
    return (h - mean) * inv * gamma + beta


def mlp_kernel(x_ref, w1_ref, w2_ref, w3_ref, vecs_ref, o_ref):
    # Static widths from the ref shapes.
    h0 = w1_ref.shape[1]
    h1 = w2_ref.shape[1]
    out_pad = w3_ref.shape[1]

    # All seven [1, *] vectors arrive as one packed [7, Wmax] f32 tile.
    vecs = vecs_ref[...]
    b1, g1, be1 = vecs[0:1, :h0], vecs[1:2, :h0], vecs[2:3, :h0]
    b2, g2, be2 = vecs[3:4, :h1], vecs[4:5, :h1], vecs[5:6, :h1]
    b3 = vecs[6:7, :out_pad]

    # bf16 operands on the MXU, f32 accumulation.
    x = x_ref[...].astype(jnp.bfloat16)

    # Layer 1: Linear + LayerNorm + ReLU.
    h = jnp.dot(x, w1_ref[...], preferred_element_type=jnp.float32) + b1
    h = jnp.maximum(_layernorm_1pass(h, g1, be1), 0.0)

    # Layer 2: Linear + LayerNorm + ReLU.
    h = jnp.dot(h.astype(jnp.bfloat16), w2_ref[...],
                preferred_element_type=jnp.float32) + b2
    h = jnp.maximum(_layernorm_1pass(h, g2, be2), 0.0)

    # Output layer (width pre-padded to a lane-dense multiple of 128; padded
    # columns of W3/b3 are exactly zero).  NOTE: zero-padded batch rows pass
    # through LayerNorm with var≈0 -> large-but-finite values via rsqrt(eps);
    # they are sliced off by the caller and must never be read back.
    out = jnp.dot(h.astype(jnp.bfloat16), w3_ref[...],
                  preferred_element_type=jnp.float32) + b3
    o_ref[...] = out.astype(o_ref.dtype)


def prepare_params(params):
    """One-time prep (outside the hot path): bf16 weights, padded output layer,
    and the seven small bias/LN vectors packed into a single [7, Wmax] array.
    Returns (prepared_arrays_dict, out_size)."""
    h0 = params["w1"].shape[1]
    h1 = params["w2"].shape[1]
    out_size = params["w3"].shape[1]
    out_pad = pl.cdiv(max(out_size, 128), 128) * 128

    w1 = params["w1"].astype(jnp.bfloat16)
    w2 = params["w2"].astype(jnp.bfloat16)
    w3 = jnp.pad(params["w3"],
                 ((0, 0), (0, out_pad - out_size))).astype(jnp.bfloat16)

    wmax = max(h0, h1, out_pad)

    def row(v, width):
        v = v.reshape(1, -1).astype(jnp.float32)
        return jnp.pad(v, ((0, 0), (0, wmax - width)))

    b3_padded = jnp.pad(params["b3"].reshape(1, -1),
                        ((0, 0), (0, out_pad - out_size)))
    vecs = jnp.concatenate(
        [row(params["b1"], h0), row(params["g1"], h0), row(params["be1"], h0),
         row(params["b2"], h1), row(params["g2"], h1), row(params["be2"], h1),
         row(b3_padded, out_pad)],
        axis=0)

    prepared = {"w1": w1, "w2": w2, "w3": w3, "vecs": vecs}
    return prepared, out_size


def pick_block_b(batch):
    """v7x has 2 TensorCores -> want >=2 parallel grid steps; v5e/v6e are
    single-TC -> one fat tile (up to 512 rows) minimizes per-step overhead."""
    kind = getattr(jax.devices()[0], "device_kind", "").lower()
    two_cores = "v7" in kind
    if two_cores and batch >= 16:
        return max(8, pl.cdiv(pl.cdiv(batch, 2), 8) * 8)
    return min(512, max(8, pl.cdiv(batch, 8) * 8))


@functools.partial(jax.jit, static_argnames=("block_b",))
def network_forward_padded(x, prepared, block_b):
    """x: [B, input_size] f32.  Returns the lane-dense padded result
    [B_pad, out_pad]; caller slices to [B, out_size] (or consumes padded)."""
    B, in_size = x.shape
    h0 = prepared["w1"].shape[1]
    h1 = prepared["w2"].shape[1]
    out_pad = prepared["w3"].shape[1]

    B_pad = pl.cdiv(B, block_b) * block_b
    x_p = x if B_pad == B else jnp.pad(x, ((0, B_pad - B), (0, 0)))

    full = lambda a: pl.BlockSpec(a.shape, lambda i: (0, 0))

    flops = 2 * B_pad * (in_size * h0 + h0 * h1 + h1 * out_pad)
    bytes_accessed = (
        x_p.size * 4
        + (prepared["w1"].size + prepared["w2"].size + prepared["w3"].size) * 2
        + prepared["vecs"].size * 4
        + B_pad * out_pad * 4)

    out = pl.pallas_call(
        mlp_kernel,
        out_shape=jax.ShapeDtypeStruct((B_pad, out_pad), x.dtype),
        grid_spec=pltpu.PrefetchScalarGridSpec(
            num_scalar_prefetch=0,
            grid=(B_pad // block_b,),
            in_specs=[
                pl.BlockSpec((block_b, in_size), lambda i: (i, 0)),  # x tile
                full(prepared["w1"]),
                full(prepared["w2"]),
                full(prepared["w3"]),
                full(prepared["vecs"]),
            ],
            out_specs=pl.BlockSpec((block_b, out_pad), lambda i: (i, 0)),
        ),
        compiler_params=pltpu.CompilerParams(
            dimension_semantics=("parallel",)),
        cost_estimate=pl.CostEstimate(
            flops=flops,
            transcendentals=2 * B_pad,          # one rsqrt per row per LayerNorm
            bytes_accessed=bytes_accessed),
    )(x_p, prepared["w1"], prepared["w2"], prepared["w3"], prepared["vecs"])

    return out


def network_forward(x, prepared, out_size, block_b):
    # Convenience wrapper: slice the padded kernel output (fold into the
    # consumer when possible to save this extra per-call op).
    out = network_forward_padded(x, prepared, block_b)
    return out[:x.shape[0], :out_size]


def init_params(key, input_size, hidden_sizes, output_size):
    """Deterministic synthetic init; Linear weights stored as [in, out]."""
    dims = [input_size] + list(hidden_sizes) + [output_size]
    keys = jax.random.split(key, 2 * len(dims))
    params = {}
    for idx, (fan_in, fan_out) in enumerate(zip(dims[:-1], dims[1:]), start=1):
        bound = 1.0 / jnp.sqrt(fan_in)
        params[f"w{idx}"] = jax.random.uniform(
            keys[2 * idx - 2], (fan_in, fan_out), jnp.float32, -bound, bound)
        params[f"b{idx}"] = jax.random.uniform(
            keys[2 * idx - 1], (1, fan_out), jnp.float32, -bound, bound)
    for idx, h in enumerate(hidden_sizes, start=1):
        params[f"g{idx}"] = jnp.ones((1, h), jnp.float32)    # LN weight = 1
        params[f"be{idx}"] = jnp.zeros((1, h), jnp.float32)  # LN bias = 0
    return params


def reference_forward(x, params, matmul_dtype=jnp.float32):
    """Pure-JAX reference. matmul_dtype=bfloat16 mirrors the kernel's MXU path."""
    def dot(a, b):
        return jnp.dot(a.astype(matmul_dtype), b.astype(matmul_dtype),
                       preferred_element_type=jnp.float32)

    def ln(h, g, b):
        mean = jnp.mean(h, axis=-1, keepdims=True)
        var = jnp.mean(jnp.square(h - mean), axis=-1, keepdims=True)
        return (h - mean) * jax.lax.rsqrt(var + LN_EPS) * g + b

    h = dot(x, params["w1"]) + params["b1"]
    h = jnp.maximum(ln(h, params["g1"], params["be1"]), 0.0)
    h = dot(h, params["w2"]) + params["b2"]
    h = jnp.maximum(ln(h, params["g2"], params["be2"]), 0.0)
    return dot(h, params["w3"]) + params["b3"]


if __name__ == "__main__":
    # Shapes consistent with the script: hidden_sizes=[256, 256], batch 256.
    batch = 256
    input_size = 16
    hidden_sizes = [256, 256]
    output_size = 8

    key = jax.random.PRNGKey(0)
    kx, kp = jax.random.split(key)
    x = jax.random.normal(kx, (batch, input_size), jnp.float32)
    params = init_params(kp, input_size, hidden_sizes, output_size)

    # One-time weight prep (cast/pad/pack) outside the hot path.
    prepared, out_size = prepare_params(params)
    block_b = pick_block_b(batch)

    out = jax.block_until_ready(network_forward(x, prepared, out_size, block_b))
    assert out.shape == (batch, output_size)

    # Tight check against a reference using the same bf16-operand matmul path,
    # loose sanity check against the pure-f32 reference.
    ref_bf16 = reference_forward(x, params, matmul_dtype=jnp.bfloat16)
    ref_f32 = reference_forward(x, params, matmul_dtype=jnp.float32)
    assert jnp.allclose(out, ref_bf16, atol=5e-3, rtol=5e-3)
    assert jnp.allclose(out, ref_f32, atol=5e-2, rtol=5e-2)

    print("KERNEL_OK")
</pallas_src>

<mosaic_0001>
module attributes {stable_mosaic.version = 11 : i64} {
  func.func @mlp_kernel(%arg0: i32, %arg1: memref<256x16xf32, #tpu.memory_space<vmem>>, %arg2: memref<16x256xbf16, #tpu.memory_space<vmem>>, %arg3: memref<256x256xbf16, #tpu.memory_space<vmem>>, %arg4: memref<256x128xbf16, #tpu.memory_space<vmem>>, %arg5: memref<7x256xf32, #tpu.memory_space<vmem>>, %arg6: memref<256x128xf32, #tpu.memory_space<vmem>>) attributes {dimension_semantics = [#tpu.dimension_semantics<parallel>], iteration_bounds = array<i64: 1>, scalar_prefetch = 0 : i64, scratch_operands = 0 : i64, tpu.core_type = #tpu.core_type<tc>, window_params = [{transform_indices = @transform_0, window_bounds = array<i64: 256, 16>}, {pipeline_mode = #tpu.pipeline_mode<synchronous>, transform_indices = @transform_1, window_bounds = array<i64: 16, 256>}, {pipeline_mode = #tpu.pipeline_mode<synchronous>, transform_indices = @transform_2, window_bounds = array<i64: 256, 256>}, {pipeline_mode = #tpu.pipeline_mode<synchronous>, transform_indices = @transform_3, window_bounds = array<i64: 256, 128>}, {pipeline_mode = #tpu.pipeline_mode<synchronous>, transform_indices = @transform_4, window_bounds = array<i64: 7, 256>}, {transform_indices = @transform_5, window_bounds = array<i64: 256, 128>}]} {
    %c0 = arith.constant 0 : index
    %c0_0 = arith.constant 0 : index
    %0 = vector.load %arg5[%c0, %c0_0] : memref<7x256xf32, #tpu.memory_space<vmem>>, vector<7x256xf32>
    %1 = vector.extract_strided_slice %0 {offsets = [0, 0], sizes = [1, 256], strides = [1, 1]} : vector<7x256xf32> to vector<1x256xf32>
    %2 = vector.extract_strided_slice %0 {offsets = [1, 0], sizes = [1, 256], strides = [1, 1]} : vector<7x256xf32> to vector<1x256xf32>
    %3 = vector.extract_strided_slice %0 {offsets = [2, 0], sizes = [1, 256], strides = [1, 1]} : vector<7x256xf32> to vector<1x256xf32>
    %4 = vector.extract_strided_slice %0 {offsets = [3, 0], sizes = [1, 256], strides = [1, 1]} : vector<7x256xf32> to vector<1x256xf32>
    %5 = vector.extract_strided_slice %0 {offsets = [4, 0], sizes = [1, 256], strides = [1, 1]} : vector<7x256xf32> to vector<1x256xf32>
    %6 = vector.extract_strided_slice %0 {offsets = [5, 0], sizes = [1, 256], strides = [1, 1]} : vector<7x256xf32> to vector<1x256xf32>
    %7 = vector.extract_strided_slice %0 {offsets = [6, 0], sizes = [1, 128], strides = [1, 1]} : vector<7x256xf32> to vector<1x128xf32>
    %c0_1 = arith.constant 0 : index
    %c0_2 = arith.constant 0 : index
    %8 = vector.load %arg1[%c0_1, %c0_2] : memref<256x16xf32, #tpu.memory_space<vmem>>, vector<256x16xf32>
    %9 = arith.truncf %8 : vector<256x16xf32> to vector<256x16xbf16>
    %c0_3 = arith.constant 0 : index
    %c0_4 = arith.constant 0 : index
    %10 = vector.load %arg2[%c0_3, %c0_4] : memref<16x256xbf16, #tpu.memory_space<vmem>>, vector<16x256xbf16>
    %cst = arith.constant dense<0.000000e+00> : vector<256x256xf32>
    %11 = tpu.matmul %9, %10, %cst {dimension_numbers = #tpu.dot_dimension_numbers<[1], [0], [0], [1], [0, 0, 1, 1], [], []>} : vector<256x16xbf16>, vector<16x256xbf16>, vector<256x256xf32> -> vector<256x256xf32>
    %12 = vector.broadcast %1 : vector<1x256xf32> to vector<256x256xf32>
    %13 = arith.addf %11, %12 : vector<256x256xf32>
    %cst_5 = arith.constant dense<0.000000e+00> : vector<256xf32>
    %14 = vector.multi_reduction <add>, %13, %cst_5 [1] : vector<256x256xf32> to vector<256xf32>
    %15 = vector.shape_cast %14 : vector<256xf32> to vector<256x1xf32>
    %cst_6 = arith.constant 3.906250e-03 : f32
    %16 = vector.broadcast %cst_6 : f32 to vector<256x1xf32>
    %17 = arith.mulf %15, %16 : vector<256x1xf32>
    %18 = arith.mulf %13, %13 : vector<256x256xf32>
    %cst_7 = arith.constant dense<0.000000e+00> : vector<256xf32>
    %19 = vector.multi_reduction <add>, %18, %cst_7 [1] : vector<256x256xf32> to vector<256xf32>
    %20 = vector.shape_cast %19 : vector<256xf32> to vector<256x1xf32>
    %cst_8 = arith.constant 3.906250e-03 : f32
    %21 = vector.broadcast %cst_8 : f32 to vector<256x1xf32>
    %22 = arith.mulf %20, %21 : vector<256x1xf32>
    %23 = arith.mulf %17, %17 : vector<256x1xf32>
    %24 = arith.subf %22, %23 : vector<256x1xf32>
    %cst_9 = arith.constant 9.99999974E-6 : f32
    %25 = vector.broadcast %cst_9 : f32 to vector<256x1xf32>
    %26 = arith.addf %24, %25 : vector<256x1xf32>
    %27 = math.rsqrt %26 : vector<256x1xf32>
    %28 = vector.broadcast %17 : vector<256x1xf32> to vector<256x256xf32>
    %29 = arith.subf %13, %28 : vector<256x256xf32>
    %30 = vector.broadcast %27 : vector<256x1xf32> to vector<256x256xf32>
    %31 = arith.mulf %29, %30 : vector<256x256xf32>
    %32 = vector.broadcast %2 : vector<1x256xf32> to vector<256x256xf32>
    %33 = arith.mulf %31, %32 : vector<256x256xf32>
    %34 = vector.broadcast %3 : vector<1x256xf32> to vector<256x256xf32>
    %35 = arith.addf %33, %34 : vector<256x256xf32>
    %cst_10 = arith.constant 0.000000e+00 : f32
    %36 = vector.broadcast %cst_10 : f32 to vector<256x256xf32>
    %37 = arith.maximumf %35, %36 : vector<256x256xf32>
    %38 = arith.truncf %37 : vector<256x256xf32> to vector<256x256xbf16>
    %c0_11 = arith.constant 0 : index
    %c0_12 = arith.constant 0 : index
    %39 = vector.load %arg3[%c0_11, %c0_12] : memref<256x256xbf16, #tpu.memory_space<vmem>>, vector<256x256xbf16>
    %cst_13 = arith.constant dense<0.000000e+00> : vector<256x256xf32>
    %40 = tpu.matmul %38, %39, %cst_13 {dimension_numbers = #tpu.dot_dimension_numbers<[1], [0], [0], [1], [0, 0, 1, 1], [], []>} : vector<256x256xbf16>, vector<256x256xbf16>, vector<256x256xf32> -> vector<256x256xf32>
    %41 = vector.broadcast %4 : vector<1x256xf32> to vector<256x256xf32>
    %42 = arith.addf %40, %41 : vector<256x256xf32>
    %cst_14 = arith.constant dense<0.000000e+00> : vector<256xf32>
    %43 = vector.multi_reduction <add>, %42, %cst_14 [1] : vector<256x256xf32> to vector<256xf32>
    %44 = vector.shape_cast %43 : vector<256xf32> to vector<256x1xf32>
    %cst_15 = arith.constant 3.906250e-03 : f32
    %45 = vector.broadcast %cst_15 : f32 to vector<256x1xf32>
    %46 = arith.mulf %44, %45 : vector<256x1xf32>
    %47 = arith.mulf %42, %42 : vector<256x256xf32>
    %cst_16 = arith.constant dense<0.000000e+00> : vector<256xf32>
    %48 = vector.multi_reduction <add>, %47, %cst_16 [1] : vector<256x256xf32> to vector<256xf32>
    %49 = vector.shape_cast %48 : vector<256xf32> to vector<256x1xf32>
    %cst_17 = arith.constant 3.906250e-03 : f32
    %50 = vector.broadcast %cst_17 : f32 to vector<256x1xf32>
    %51 = arith.mulf %49, %50 : vector<256x1xf32>
    %52 = arith.mulf %46, %46 : vector<256x1xf32>
    %53 = arith.subf %51, %52 : vector<256x1xf32>
    %cst_18 = arith.constant 9.99999974E-6 : f32
    %54 = vector.broadcast %cst_18 : f32 to vector<256x1xf32>
    %55 = arith.addf %53, %54 : vector<256x1xf32>
    %56 = math.rsqrt %55 : vector<256x1xf32>
    %57 = vector.broadcast %46 : vector<256x1xf32> to vector<256x256xf32>
    %58 = arith.subf %42, %57 : vector<256x256xf32>
    %59 = vector.broadcast %56 : vector<256x1xf32> to vector<256x256xf32>
    %60 = arith.mulf %58, %59 : vector<256x256xf32>
    %61 = vector.broadcast %5 : vector<1x256xf32> to vector<256x256xf32>
    %62 = arith.mulf %60, %61 : vector<256x256xf32>
    %63 = vector.broadcast %6 : vector<1x256xf32> to vector<256x256xf32>
    %64 = arith.addf %62, %63 : vector<256x256xf32>
    %cst_19 = arith.constant 0.000000e+00 : f32
    %65 = vector.broadcast %cst_19 : f32 to vector<256x256xf32>
    %66 = arith.maximumf %64, %65 : vector<256x256xf32>
    %67 = arith.truncf %66 : vector<256x256xf32> to vector<256x256xbf16>
    %c0_20 = arith.constant 0 : index
    %c0_21 = arith.constant 0 : index
    %68 = vector.load %arg4[%c0_20, %c0_21] : memref<256x128xbf16, #tpu.memory_space<vmem>>, vector<256x128xbf16>
    %cst_22 = arith.constant dense<0.000000e+00> : vector<256x128xf32>
    %69 = tpu.matmul %67, %68, %cst_22 {dimension_numbers = #tpu.dot_dimension_numbers<[1], [0], [0], [1], [0, 0, 1, 1], [], []>} : vector<256x256xbf16>, vector<256x128xbf16>, vector<256x128xf32> -> vector<256x128xf32>
    %70 = vector.broadcast %7 : vector<1x128xf32> to vector<256x128xf32>
    %71 = arith.addf %69, %70 : vector<256x128xf32>
    %c0_23 = arith.constant 0 : index
    %c0_24 = arith.constant 0 : index
    %72 = vector.load %arg6[%c0_23, %c0_24] : memref<256x128xf32, #tpu.memory_space<vmem>>, vector<256x128xf32>
    tpu.vector_store %arg6[%c0_23, %c0_24], %71 {strides = array<i32>} : memref<256x128xf32, #tpu.memory_space<vmem>>, vector<256x128xf32>,
    return
  }
  func.func @transform_0(%arg0: i32) -> (i32, i32) {
    %c0_i32 = arith.constant 0 : i32
    %c0_i32_0 = arith.constant 0 : i32
    return %arg0, %c0_i32 : i32, i32
  }
  func.func @transform_1(%arg0: i32) -> (i32, i32) {
    %c0_i32 = arith.constant 0 : i32
    %c0_i32_0 = arith.constant 0 : i32
    %c0_i32_1 = arith.constant 0 : i32
    return %c0_i32, %c0_i32_0 : i32, i32
  }
  func.func @transform_2(%arg0: i32) -> (i32, i32) {
    %c0_i32 = arith.constant 0 : i32
    %c0_i32_0 = arith.constant 0 : i32
    %c0_i32_1 = arith.constant 0 : i32
    return %c0_i32, %c0_i32_0 : i32, i32
  }
  func.func @transform_3(%arg0: i32) -> (i32, i32) {
    %c0_i32 = arith.constant 0 : i32
    %c0_i32_0 = arith.constant 0 : i32
    %c0_i32_1 = arith.constant 0 : i32
    return %c0_i32, %c0_i32_0 : i32, i32
  }
  func.func @transform_4(%arg0: i32) -> (i32, i32) {
    %c0_i32 = arith.constant 0 : i32
    %c0_i32_0 = arith.constant 0 : i32
    %c0_i32_1 = arith.constant 0 : i32
    return %c0_i32, %c0_i32_0 : i32, i32
  }
  func.func @transform_5(%arg0: i32) -> (i32, i32) {
    %c0_i32 = arith.constant 0 : i32
    %c0_i32_0 = arith.constant 0 : i32
    return %arg0, %c0_i32 : i32, i32
  }
}

</mosaic_0001>

<llo_original>
// kernel: network_forward_padded.1
$region0: #{network_forward_padded.1}
  #allocation0 [shape = 'u32[]', space=smem, size = 0x4, offset = 0x4, fixed_abs, tag = 'smem constant byte address 0x4 - core index']
  #allocation1 [shape = 'u32[144,128]{1,0:T(1,128)}', space=vmem, size = 0x12000, scoped, tag = 'internal scratch']
  %s0 = inlined_call_operand.vmem [shape: f32[256,16], index: 0, kind: input, shape index: {}]
  %s1 = inlined_call_operand.vmem [shape: bf16[16,256], index: 1, kind: input, shape index: {}]
  %s2 = inlined_call_operand.vmem [shape: bf16[256,256], index: 2, kind: input, shape index: {}]
  %s3 = inlined_call_operand.hbm [shape: bf16[256,128], index: 3, kind: input, shape index: {}]
  %s4 = inlined_call_operand.vmem [shape: f32[7,256], index: 4, kind: input, shape index: {}]
  %s5 = inlined_call_operand.hbm [shape: f32[256,128], index: 5, kind: output, shape index: {}]
  %s6 = sld [smem:[#allocation0]]
  $region34: #{network_forward_padded.1} parent=0
    _
  %s8 = ssub.s32 1, %s6
  %s9 = scalar_select 0, %s8, %s6
  $region1: #{network_forward_padded.1} parent=0
    #allocation2 [shape = 'u8[65536]{0}', space=vmem, size = 0x10000, scoped, tag = 'input window, operand 3, single buffered']
    #allocation3 [shape = 's32[1]{0}', space=sflag, size = 0x4, scoped, tag = 'scoped memory for network_forward_padded.1']
    #allocation4 [shape = 's32[1]{0}', space=sflag, size = 0x4, scoped, tag = 'scoped memory for network_forward_padded.1']
    #allocation5 [shape = 'u8[131072]{0}', space=vmem, size = 0x20000, scoped, tag = 'output window, operand 0, single buffered']
    %10 = vsyncpa [#allocation3], 0
    %11 = vsyncpa [#allocation4], 0
    // Predicated region
    $region2: #{network_forward_padded.1} parent=1 // pred_check
      _
    $region3: #{network_forward_padded.1} parent=1 // pred_check_branch
      %13 = sbr.rel (0) target = $region5
    $region4: #{network_forward_padded.1} parent=1 // pred_region
      _
    $region5: #{network_forward_padded.1} parent=1 // pred_fallthru
      _
    // Predicated region
    $region6: #{network_forward_padded.1} parent=1 // pred_check
      _
    $region7: #{network_forward_padded.1} parent=1 // pred_check_branch
      %15 = sbr.rel (0) target = $region9
    $region8: #{network_forward_padded.1} parent=1 // pred_region
      _
    $region9: #{network_forward_padded.1} parent=1 // pred_fallthru
      _
    // Predicated region
    $region10: #{network_forward_padded.1} parent=1 // pred_check
      _
    $region11: #{network_forward_padded.1} parent=1 // pred_check_branch
      %17 = sbr.rel (0) target = $region13
    $region12: #{network_forward_padded.1} parent=1 // pred_region
      _
    $region13: #{network_forward_padded.1} parent=1 // pred_fallthru
      _
    // Predicated region
    $region14: #{network_forward_padded.1} parent=1 // pred_check
      _
    $region15: #{network_forward_padded.1} parent=1 // pred_check_branch
      %19 = sbr.rel (0) target = $region17
    $region16: #{network_forward_padded.1} parent=1 // pred_region
      %s21 = ssub.s32 2048, 2048
      %22 = vsyncadd [#allocation3], %s21
      %s23 = sshll.u32 [#allocation2], 4
      %s24 = int_to_ptr.vmem [resolvable:$true] %s23
      %29 = dma.hbm_to_vmem [thread:$0]  %s3, 2048, %s24, [#allocation3], 64, 64, 4
    $region17: #{network_forward_padded.1} parent=1 // pred_fallthru
      _
    // Predicated region
    $region18: #{network_forward_padded.1} parent=1 // pred_check
      _
    $region19: #{network_forward_padded.1} parent=1 // pred_check_branch
      %31 = sbr.rel (0) target = $region21
    $region20: #{network_forward_padded.1} parent=1 // pred_region
      _
    $region21: #{network_forward_padded.1} parent=1 // pred_fallthru
      _
    // Predicated region
    $region22: #{network_forward_padded.1} parent=1 // pred_check
      _
    $region23: #{network_forward_padded.1} parent=1 // pred_check_branch
      %33 = sbr.rel (0) target = $region25
    $region24: #{network_forward_padded.1} parent=1 // pred_region
      %34 = dma.done [#allocation3], 2048
    $region25: #{network_forward_padded.1} parent=1 // pred_fallthru
      _
    %v36 = vld [vmem:[%s4] sm:$0x7f]
    %v37 = vld [vmem:[%s4 + $0x8] sm:$0x7f]
    %v38 = vld [vmem:[%s0] sm:$0xff]
    %v39 = vld [vmem:[%s0 + $0x8] sm:$0xff]
    %v40 = vld [vmem:[%s0 + $0x10] sm:$0xff]
    %v41 = vld [vmem:[%s0 + $0x18] sm:$0xff]
    %v42 = vld [vmem:[%s0 + $0x20] sm:$0xff]
    %v43 = vld [vmem:[%s0 + $0x28] sm:$0xff]
    %v44 = vld [vmem:[%s0 + $0x30] sm:$0xff]
    %v45 = vld [vmem:[%s0 + $0x38] sm:$0xff]
    %v46 = vld [vmem:[%s0 + $0x40] sm:$0xff]
    %v47 = vld [vmem:[%s0 + $0x48] sm:$0xff]
    %v48 = vld [vmem:[%s0 + $0x50] sm:$0xff]
    %v49 = vld [vmem:[%s0 + $0x58] sm:$0xff]
    %v50 = vld [vmem:[%s0 + $0x60] sm:$0xff]
    %v51 = vld [vmem:[%s0 + $0x68] sm:$0xff]
    %v52 = vld [vmem:[%s0 + $0x70] sm:$0xff]
    %v53 = vld [vmem:[%s0 + $0x78] sm:$0xff]
    %v54 = vld [vmem:[%s0 + $0x80] sm:$0xff]
    %v55 = vld [vmem:[%s0 + $0x88] sm:$0xff]
    %v56 = vld [vmem:[%s0 + $0x90] sm:$0xff]
    %v57 = vld [vmem:[%s0 + $0x98] sm:$0xff]
    %v58 = vld [vmem:[%s0 + $0xa0] sm:$0xff]
    %v59 = vld [vmem:[%s0 + $0xa8] sm:$0xff]
    %v60 = vld [vmem:[%s0 + $0xb0] sm:$0xff]
    %v61 = vld [vmem:[%s0 + $0xb8] sm:$0xff]
    %v62 = vld [vmem:[%s0 + $0xc0] sm:$0xff]
    %v63 = vld [vmem:[%s0 + $0xc8] sm:$0xff]
    %v64 = vld [vmem:[%s0 + $0xd0] sm:$0xff]
    %v65 = vld [vmem:[%s0 + $0xd8] sm:$0xff]
    %v66 = vld [vmem:[%s0 + $0xe0] sm:$0xff]
    %v67 = vld [vmem:[%s0 + $0xe8] sm:$0xff]
    %v68 = vld [vmem:[%s0 + $0xf0] sm:$0xff]
    %v69 = vld [vmem:[%s0 + $0xf8] sm:$0xff]
    %v70 = vpack.c.bf16 %v39, %v38
    %v71 = vpack.c.bf16 %v41, %v40
    %v72 = vpack.c.bf16 %v43, %v42
    %v73 = vpack.c.bf16 %v45, %v44
    %v74 = vpack.c.bf16 %v47, %v46
    %v75 = vpack.c.bf16 %v49, %v48
    %v76 = vpack.c.bf16 %v51, %v50
    %v77 = vpack.c.bf16 %v53, %v52
    %v78 = vpack.c.bf16 %v55, %v54
    %v79 = vpack.c.bf16 %v57, %v56
    %v80 = vpack.c.bf16 %v59, %v58
    %v81 = vpack.c.bf16 %v61, %v60
    %v82 = vpack.c.bf16 %v63, %v62
    %v83 = vpack.c.bf16 %v65, %v64
    %v84 = vpack.c.bf16 %v67, %v66
    %v85 = vpack.c.bf16 %v69, %v68
    %v86 = vld [vmem:[%s1] sm:$0xff]
    %v87 = vld [vmem:[%s1 + $0x8] sm:$0xff]
    %v88 = vlaneseq
    %v89 = vshrl.u32 %v88, 7
    %v90 = vsub.s32 0, %v89
    %v91 = vrot.slane %v36, %v90
    %v92 = vlaneseq
    %v93 = vshrl.u32 %v92, 7
    %v94 = vsub.s32 0, %v93
    %v95 = vrot.slane %v37, %v94
    %v98 = vunpack.c.l.b16 %v86
    %v99 = vunpack.c.h.b16 %v86
    %v100 = vunpack.c.l.b16 %v87
    %v101 = vunpack.c.h.b16 %v87
    %v102 = vpack.c.b16 %v100, %v98
    %v103 = vpack.c.b16 %v101, %v99
    %vm106 = vcmask 130048
    %v108 = vsel %vm106, %v70, 0
    %v111 = vsel %vm106, %v71, 0
    %v114 = vsel %vm106, %v72, 0
    %v117 = vsel %vm106, %v73, 0
    %v120 = vsel %vm106, %v74, 0
    %v123 = vsel %vm106, %v75, 0
    %v126 = vsel %vm106, %v76, 0
    %v129 = vsel %vm106, %v77, 0
    %v132 = vsel %vm106, %v78, 0
    %v135 = vsel %vm106, %v79, 0
    %v138 = vsel %vm106, %v80, 0
    %v141 = vsel %vm106, %v81, 0
    %v144 = vsel %vm106, %v82, 0
    %v147 = vsel %vm106, %v83, 0
    %v150 = vsel %vm106, %v84, 0
    %v153 = vsel %vm106, %v85, 0
    %155 = vmatprep.subr.bf16.mxu0 %v103
    %156 = vmatpush1.bf16.msra.mxu0 %v102
    %157 = vmatprep.subr.bf16.mxu0 0
    %158 = vmatpush1.bf16.msra.mxu0 0
    %159 = vmatprep.subr.bf16.mxu0 0
    %160 = vmatpush1.bf16.msra.mxu0 0
    %161 = vmatprep.subr.bf16.mxu0 0
    %162 = vmatpush1.bf16.msra.mxu0 0
    %163 = vmatprep.subr.bf16.mxu0 0
    %164 = vmatpush1.bf16.msra.mxu0 0
    %165 = vmatprep.subr.bf16.mxu0 0
    %166 = vmatpush1.bf16.msra.mxu0 0
    %167 = vmatprep.subr.bf16.mxu0 0
    %168 = vmatpush1.bf16.msra.mxu0 0
    %169 = vmatprep.subr.bf16.mxu0 0
    %170 = vmatpush1.bf16.msra.mxu0 0
    %171 = vmatprep.subr.bf16.mxu0 0
    %172 = vmatpush1.bf16.msra.mxu0 0
    %173 = vmatprep.subr.bf16.mxu0 0
    %174 = vmatpush1.bf16.msra.mxu0 0
    %175 = vmatprep.subr.bf16.mxu0 0
    %176 = vmatpush1.bf16.msra.mxu0 0
    %177 = vmatprep.subr.bf16.mxu0 0
    %178 = vmatpush1.bf16.msra.mxu0 0
    %179 = vmatprep.subr.bf16.mxu0 0
    %180 = vmatpush1.bf16.msra.mxu0 0
    %181 = vmatprep.subr.bf16.mxu0 0
    %182 = vmatpush1.bf16.msra.mxu0 0
    %183 = vmatprep.subr.bf16.mxu0 0
    %184 = vmatpush1.bf16.msra.mxu0 0
    %185 = vmatprep.subr.bf16.mxu0 0
    %186 = vmatpush1.bf16.msra.mxu0 0
    %187 = vmatprep.mubr.bf16.mxu0 0
    %188 = vmatmul.mubr.bf16.gmra.mrb[0].mxu0 %v108
    %v189 = vpop.f32.mrb[0].mxu0
    %v190 = vadd.f32 %v91, %v189
    %v191 = vpop.f32.mrb[0].mxu0
    %v192 = vadd.f32 %v95, %v191
    %v193 = vpop.f32.mrb[0].mxu0
    %v194 = vadd.f32 %v91, %v193
    %v195 = vpop.f32.mrb[0].mxu0
    %v196 = vadd.f32 %v95, %v195
    %197 = vmatprep.mubr.bf16.mxu0 0
    %198 = vmatmul.mubr.bf16.gmra.mrb[0].mxu0 %v111
    %v199 = vpop.f32.mrb[0].mxu0
    %v200 = vadd.f32 %v91, %v199
    %v201 = vpop.f32.mrb[0].mxu0
    %v202 = vadd.f32 %v95, %v201
    %v203 = vpop.f32.mrb[0].mxu0
    %v204 = vadd.f32 %v91, %v203
    %v205 = vpop.f32.mrb[0].mxu0
    %v206 = vadd.f32 %v95, %v205
    %207 = vmatprep.mubr.bf16.mxu0 0
    %208 = vmatmul.mubr.bf16.gmra.mrb[0].mxu0 %v114
    %v209 = vpop.f32.mrb[0].mxu0
    %v210 = vadd.f32 %v91, %v209
    %v211 = vpop.f32.mrb[0].mxu0
    %v212 = vadd.f32 %v95, %v211
    %v213 = vpop.f32.mrb[0].mxu0
    %v214 = vadd.f32 %v91, %v213
    %v215 = vpop.f32.mrb[0].mxu0
    %v216 = vadd.f32 %v95, %v215
    %217 = vmatprep.mubr.bf16.mxu0 0
    %218 = vmatmul.mubr.bf16.gmra.mrb[0].mxu0 %v117
    %v219 = vpop.f32.mrb[0].mxu0
    %v220 = vadd.f32 %v91, %v219
    %v221 = vpop.f32.mrb[0].mxu0
    %v222 = vadd.f32 %v95, %v221
    %v223 = vpop.f32.mrb[0].mxu0
    %v224 = vadd.f32 %v91, %v223
    %v225 = vpop.f32.mrb[0].mxu0
    %v226 = vadd.f32 %v95, %v225
    %227 = vmatprep.mubr.bf16.mxu0 0
    %228 = vmatmul.mubr.bf16.gmra.mrb[0].mxu0 %v120
    %v229 = vpop.f32.mrb[0].mxu0
    %v230 = vadd.f32 %v91, %v229
    %v231 = vpop.f32.mrb[0].mxu0
    %v232 = vadd.f32 %v95, %v231
    %v233 = vpop.f32.mrb[0].mxu0
    %v234 = vadd.f32 %v91, %v233
    %v235 = vpop.f32.mrb[0].mxu0
    %v236 = vadd.f32 %v95, %v235
    %237 = vmatprep.mubr.bf16.mxu0 0
    %238 = vmatmul.mubr.bf16.gmra.mrb[0].mxu0 %v123
    %v239 = vpop.f32.mrb[0].mxu0
    %v240 = vadd.f32 %v91, %v239
    %v241 = vpop.f32.mrb[0].mxu0
    %v242 = vadd.f32 %v95, %v241
    %v243 = vpop.f32.mrb[0].mxu0
    %v244 = vadd.f32 %v91, %v243
    %v245 = vpop.f32.mrb[0].mxu0
    %v246 = vadd.f32 %v95, %v245
    %247 = vmatprep.mubr.bf16.mxu0 0
    %248 = vmatmul.mubr.bf16.gmra.mrb[0].mxu0 %v126
    %v249 = vpop.f32.mrb[0].mxu0
    %v250 = vadd.f32 %v91, %v249
    %v251 = vpop.f32.mrb[0].mxu0
    %v252 = vadd.f32 %v95, %v251
    %v253 = vpop.f32.mrb[0].mxu0
    %v254 = vadd.f32 %v91, %v253
    %v255 = vpop.f32.mrb[0].mxu0
    %v256 = vadd.f32 %v95, %v255
    %257 = vmatprep.mubr.bf16.mxu0 0
    %258 = vmatmul.mubr.bf16.gmra.mrb[0].mxu0 %v129
    %v259 = vpop.f32.mrb[0].mxu0
    %v260 = vadd.f32 %v91, %v259
    %v261 = vpop.f32.mrb[0].mxu0
    %v262 = vadd.f32 %v95, %v261
    %v263 = vpop.f32.mrb[0].mxu0
    %v264 = vadd.f32 %v91, %v263
    %v265 = vpop.f32.mrb[0].mxu0
    %v266 = vadd.f32 %v95, %v265
    %267 = vmatprep.mubr.bf16.mxu0 0
    %268 = vmatmul.mubr.bf16.gmra.mrb[0].mxu0 %v132
    %v269 = vpop.f32.mrb[0].mxu0
    %v270 = vadd.f32 %v91, %v269
    %v271 = vpop.f32.mrb[0].mxu0
    %v272 = vadd.f32 %v95, %v271
    %v273 = vpop.f32.mrb[0].mxu0
    %v274 = vadd.f32 %v91, %v273
    %v275 = vpop.f32.mrb[0].mxu0
    %v276 = vadd.f32 %v95, %v275
    %277 = vmatprep.mubr.bf16.mxu0 0
    %278 = vmatmul.mubr.bf16.gmra.mrb[0].mxu0 %v135
    %v279 = vpop.f32.mrb[0].mxu0
    %v280 = vadd.f32 %v91, %v279
    %v281 = vpop.f32.mrb[0].mxu0
    %v282 = vadd.f32 %v95, %v281
    %v283 = vpop.f32.mrb[0].mxu0
    %v284 = vadd.f32 %v91, %v283
    %v285 = vpop.f32.mrb[0].mxu0
    %v286 = vadd.f32 %v95, %v285
    %287 = vmatprep.mubr.bf16.mxu0 0
    %288 = vmatmul.mubr.bf16.gmra.mrb[0].mxu0 %v138
    %v289 = vpop.f32.mrb[0].mxu0
    %v290 = vadd.f32 %v91, %v289
    %v291 = vpop.f32.mrb[0].mxu0
    %v292 = vadd.f32 %v95, %v291
    %v293 = vpop.f32.mrb[0].mxu0
    %v294 = vadd.f32 %v91, %v293
    %v295 = vpop.f32.mrb[0].mxu0
    %v296 = vadd.f32 %v95, %v295
    %297 = vmatprep.mubr.bf16.mxu0 0
    %298 = vmatmul.mubr.bf16.gmra.mrb[0].mxu0 %v141
    %v299 = vpop.f32.mrb[0].mxu0
    %v300 = vadd.f32 %v91, %v299
    %v301 = vpop.f32.mrb[0].mxu0
    %v302 = vadd.f32 %v95, %v301
    %v303 = vpop.f32.mrb[0].mxu0
    %v304 = vadd.f32 %v91, %v303
    %v305 = vpop.f32.mrb[0].mxu0
    %v306 = vadd.f32 %v95, %v305
    %307 = vmatprep.mubr.bf16.mxu0 0
    %308 = vmatmul.mubr.bf16.gmra.mrb[0].mxu0 %v144
    %v309 = vpop.f32.mrb[0].mxu0
    %v310 = vadd.f32 %v91, %v309
    %v311 = vpop.f32.mrb[0].mxu0
    %v312 = vadd.f32 %v95, %v311
    %v313 = vpop.f32.mrb[0].mxu0
    %v314 = vadd.f32 %v91, %v313
    %v315 = vpop.f32.mrb[0].mxu0
    %v316 = vadd.f32 %v95, %v315
    %317 = vmatprep.mubr.bf16.mxu0 0
    %318 = vmatmul.mubr.bf16.gmra.mrb[0].mxu0 %v147
    %v319 = vpop.f32.mrb[0].mxu0
    %v320 = vadd.f32 %v91, %v319
    %v321 = vpop.f32.mrb[0].mxu0
    %v322 = vadd.f32 %v95, %v321
    %v323 = vpop.f32.mrb[0].mxu0
    %v324 = vadd.f32 %v91, %v323
    %v325 = vpop.f32.mrb[0].mxu0
    %v326 = vadd.f32 %v95, %v325
    %327 = vmatprep.mubr.bf16.mxu0 0
    %328 = vmatmul.mubr.bf16.gmra.mrb[0].mxu0 %v150
    %v329 = vpop.f32.mrb[0].mxu0
    %v330 = vadd.f32 %v91, %v329
    %v331 = vpop.f32.mrb[0].mxu0
    %v332 = vadd.f32 %v95, %v331
    %v333 = vpop.f32.mrb[0].mxu0
    %v334 = vadd.f32 %v91, %v333
    %v335 = vpop.f32.mrb[0].mxu0
    %v336 = vadd.f32 %v95, %v335
    %337 = vmatprep.mubr.bf16.mxu0 0
    %338 = vmatmul.mubr.bf16.gmra.mrb[0].mxu0 %v153
    %v339 = vpop.f32.mrb[0].mxu0
    %v340 = vadd.f32 %v91, %v339
    %v341 = vpop.f32.mrb[0].mxu0
    %v342 = vadd.f32 %v95, %v341
    %v343 = vpop.f32.mrb[0].mxu0
    %v344 = vadd.f32 %v91, %v343
    %v345 = vpop.f32.mrb[0].mxu0
    %v346 = vadd.f32 %v95, %v345
    %347 = vdwg.mxu0
    %v348 = vadd.f32 %v190, %v192
    %349 = vadd.xlane.f32.xlu0 %v348
    %v350 = vpop.xlane.xlu0 %349
    %v351 = vadd.f32 %v194, %v196
    %352 = vadd.xlane.f32.xlu0 %v351
    %v353 = vpop.xlane.xlu0 %352
    %v354 = vadd.f32 %v200, %v202
    %355 = vadd.xlane.f32.xlu0 %v354
    %v356 = vpop.xlane.xlu0 %355
    %v357 = vadd.f32 %v204, %v206
    %358 = vadd.xlane.f32.xlu0 %v357
    %v359 = vpop.xlane.xlu0 %358
    %v360 = vadd.f32 %v210, %v212
    %361 = vadd.xlane.f32.xlu0 %v360
    %v362 = vpop.xlane.xlu0 %361
    %v363 = vadd.f32 %v214, %v216
    %364 = vadd.xlane.f32.xlu0 %v363
    %v365 = vpop.xlane.xlu0 %364
    %v366 = vadd.f32 %v220, %v222
    %367 = vadd.xlane.f32.xlu0 %v366
    %v368 = vpop.xlane.xlu0 %367
    %v369 = vadd.f32 %v224, %v226
    %370 = vadd.xlane.f32.xlu0 %v369
    %v371 = vpop.xlane.xlu0 %370
    %v372 = vadd.f32 %v230, %v232
    %373 = vadd.xlane.f32.xlu0 %v372
    %v374 = vpop.xlane.xlu0 %373
    %v375 = vadd.f32 %v234, %v236
    %376 = vadd.xlane.f32.xlu0 %v375
    %v377 = vpop.xlane.xlu0 %376
    %v378 = vadd.f32 %v240, %v242
    %379 = vadd.xlane.f32.xlu0 %v378
    %v380 = vpop.xlane.xlu0 %379
    %v381 = vadd.f32 %v244, %v246
    %382 = vadd.xlane.f32.xlu0 %v381
    %v383 = vpop.xlane.xlu0 %382
    %v384 = vadd.f32 %v250, %v252
    %385 = vadd.xlane.f32.xlu0 %v384
    %v386 = vpop.xlane.xlu0 %385
    %v387 = vadd.f32 %v254, %v256
    %388 = vadd.xlane.f32.xlu0 %v387
    %v389 = vpop.xlane.xlu0 %388
    %v390 = vadd.f32 %v260, %v262
    %391 = vadd.xlane.f32.xlu0 %v390
    %v392 = vpop.xlane.xlu0 %391
    %v393 = vadd.f32 %v264, %v266
    %394 = vadd.xlane.f32.xlu0 %v393
    %v395 = vpop.xlane.xlu0 %394
    %v396 = vadd.f32 %v270, %v272
    %397 = vadd.xlane.f32.xlu0 %v396
    %v398 = vpop.xlane.xlu0 %397
    %v399 = vadd.f32 %v274, %v276
    %400 = vadd.xlane.f32.xlu0 %v399
    %v401 = vpop.xlane.xlu0 %400
    %v402 = vadd.f32 %v280, %v282
    %403 = vadd.xlane.f32.xlu0 %v402
    %v404 = vpop.xlane.xlu0 %403
    %v405 = vadd.f32 %v284, %v286
    %406 = vadd.xlane.f32.xlu0 %v405
    %v407 = vpop.xlane.xlu0 %406
    %v408 = vadd.f32 %v290, %v292
    %409 = vadd.xlane.f32.xlu0 %v408
    %v410 = vpop.xlane.xlu0 %409
    %v411 = vadd.f32 %v294, %v296
    %412 = vadd.xlane.f32.xlu0 %v411
    %v413 = vpop.xlane.xlu0 %412
    %v414 = vadd.f32 %v300, %v302
    %415 = vadd.xlane.f32.xlu0 %v414
    %v416 = vpop.xlane.xlu0 %415
    %v417 = vadd.f32 %v304, %v306
    %418 = vadd.xlane.f32.xlu0 %v417
    %v419 = vpop.xlane.xlu0 %418
    %v420 = vadd.f32 %v310, %v312
    %421 = vadd.xlane.f32.xlu0 %v420
    %v422 = vpop.xlane.xlu0 %421
    %v423 = vadd.f32 %v314, %v316
    %424 = vadd.xlane.f32.xlu0 %v423
    %v425 = vpop.xlane.xlu0 %424
    %v426 = vadd.f32 %v320, %v322
    %427 = vadd.xlane.f32.xlu0 %v426
    %v428 = vpop.xlane.xlu0 %427
    %v429 = vadd.f32 %v324, %v326
    %430 = vadd.xlane.f32.xlu0 %v429
    %v431 = vpop.xlane.xlu0 %430
    %v432 = vadd.f32 %v330, %v332
    %433 = vadd.xlane.f32.xlu0 %v432
    %v434 = vpop.xlane.xlu0 %433
    %v435 = vadd.f32 %v334, %v336
    %436 = vadd.xlane.f32.xlu0 %v435
    %v437 = vpop.xlane.xlu0 %436
    %v438 = vadd.f32 %v340, %v342
    %439 = vadd.xlane.f32.xlu0 %v438
    %v440 = vpop.xlane.xlu0 %439
    %v441 = vadd.f32 %v344, %v346
    %442 = vadd.xlane.f32.xlu0 %v441
    %v443 = vpop.xlane.xlu0 %442
    %v444 = vmul.f32 %v350, 0.00390625
    %v445 = vmul.f32 %v353, 0.00390625
    %v446 = vmul.f32 %v356, 0.00390625
    %v447 = vmul.f32 %v359, 0.00390625
    %v448 = vmul.f32 %v362, 0.00390625
    %v449 = vmul.f32 %v365, 0.00390625
    %v450 = vmul.f32 %v368, 0.00390625
    %v451 = vmul.f32 %v371, 0.00390625
    %v452 = vmul.f32 %v374, 0.00390625
    %v453 = vmul.f32 %v377, 0.00390625
    %v454 = vmul.f32 %v380, 0.00390625
    %v455 = vmul.f32 %v383, 0.00390625
    %v456 = vmul.f32 %v386, 0.00390625
    %v457 = vmul.f32 %v389, 0.00390625
    %v458 = vmul.f32 %v392, 0.00390625
    %v459 = vmul.f32 %v395, 0.00390625
    %v460 = vmul.f32 %v398, 0.00390625
    %v461 = vmul.f32 %v401, 0.00390625
    %v462 = vmul.f32 %v404, 0.00390625
    %v463 = vmul.f32 %v407, 0.00390625
    %v464 = vmul.f32 %v410, 0.00390625
    %v465 = vmul.f32 %v413, 0.00390625
    %v466 = vmul.f32 %v416, 0.00390625
    %v467 = vmul.f32 %v419, 0.00390625
    %v468 = vmul.f32 %v422, 0.00390625
    %v469 = vmul.f32 %v425, 0.00390625
    %v470 = vmul.f32 %v428, 0.00390625
    %v471 = vmul.f32 %v431, 0.00390625
    %v472 = vmul.f32 %v434, 0.00390625
    %v473 = vmul.f32 %v437, 0.00390625
    %v474 = vmul.f32 %v440, 0.00390625
    %v475 = vmul.f32 %v443, 0.00390625
    %v476 = vmul.f32 %v190, %v190
    %v477 = vmul.f32 %v192, %v192
    %v478 = vmul.f32 %v194, %v194
    %v479 = vmul.f32 %v196, %v196
    %v480 = vmul.f32 %v200, %v200
    %v481 = vmul.f32 %v202, %v202
    %v482 = vmul.f32 %v204, %v204
    %v483 = vmul.f32 %v206, %v206
    %v484 = vmul.f32 %v210, %v210
    %v485 = vmul.f32 %v212, %v212
    %v486 = vmul.f32 %v214, %v214
    %v487 = vmul.f32 %v216, %v216
    %v488 = vmul.f32 %v220, %v220
    %v489 = vmul.f32 %v222, %v222
    %v490 = vmul.f32 %v224, %v224
    %v491 = vmul.f32 %v226, %v226
    %v492 = vmul.f32 %v230, %v230
    %v493 = vmul.f32 %v232, %v232
    %v494 = vmul.f32 %v234, %v234
    %v495 = vmul.f32 %v236, %v236
    %v496 = vmul.f32 %v240, %v240
    %v497 = vmul.f32 %v242, %v242
    %v498 = vmul.f32 %v244, %v244
    %v499 = vmul.f32 %v246, %v246
    %v500 = vmul.f32 %v250, %v250
    %v501 = vmul.f32 %v252, %v252
    %v502 = vmul.f32 %v254, %v254
    %v503 = vmul.f32 %v256, %v256
    %v504 = vmul.f32 %v260, %v260
    %v505 = vmul.f32 %v262, %v262
    %v506 = vmul.f32 %v264, %v264
    %v507 = vmul.f32 %v266, %v266
    %v508 = vmul.f32 %v270, %v270
    %v509 = vmul.f32 %v272, %v272
    %v510 = vmul.f32 %v274, %v274
    %v511 = vmul.f32 %v276, %v276
    %v512 = vmul.f32 %v280, %v280
    %v513 = vmul.f32 %v282, %v282
    %v514 = vmul.f32 %v284, %v284
    %v515 = vmul.f32 %v286, %v286
    %v516 = vmul.f32 %v290, %v290
    %v517 = vmul.f32 %v292, %v292
    %v518 = vmul.f32 %v294, %v294
    %v519 = vmul.f32 %v296, %v296
    %v520 = vmul.f32 %v300, %v300
    %v521 = vmul.f32 %v302, %v302
    %v522 = vmul.f32 %v304, %v304
    %v523 = vmul.f32 %v306, %v306
    %v524 = vmul.f32 %v310, %v310
    %v525 = vmul.f32 %v312, %v312
    %v526 = vmul.f32 %v314, %v314
    %v527 = vmul.f32 %v316, %v316
    %v528 = vmul.f32 %v320, %v320
    %v529 = vmul.f32 %v322, %v322
    %v530 = vmul.f32 %v324, %v324
    %v531 = vmul.f32 %v326, %v326
    %v532 = vmul.f32 %v330, %v330
    %v533 = vmul.f32 %v332, %v332
    %v534 = vmul.f32 %v334, %v334
    %v535 = vmul.f32 %v336, %v336
    %v536 = vmul.f32 %v340, %v340
    %v537 = vmul.f32 %v342, %v342
    %v538 = vmul.f32 %v344, %v344
    %v539 = vmul.f32 %v346, %v346
    %v540 = vadd.f32 %v476, %v477
    %541 = vadd.xlane.f32.xlu0 %v540
    %v542 = vpop.xlane.xlu0 %541
    %v543 = vadd.f32 %v478, %v479
    %544 = vadd.xlane.f32.xlu0 %v543
    %v545 = vpop.xlane.xlu0 %544
    %v546 = vadd.f32 %v480, %v481
    %547 = vadd.xlane.f32.xlu0 %v546
    %v548 = vpop.xlane.xlu0 %547
    %v549 = vadd.f32 %v482, %v483
    %550 = vadd.xlane.f32.xlu0 %v549
    %v551 = vpop.xlane.xlu0 %550
    %v552 = vadd.f32 %v484, %v485
    %553 = vadd.xlane.f32.xlu0 %v552
    %v554 = vpop.xlane.xlu0 %553
    %v555 = vadd.f32 %v486, %v487
    %556 = vadd.xlane.f32.xlu0 %v555
    %v557 = vpop.xlane.xlu0 %556
    %v558 = vadd.f32 %v488, %v489
    %559 = vadd.xlane.f32.xlu0 %v558
    %v560 = vpop.xlane.xlu0 %559
    %v561 = vadd.f32 %v490, %v491
    %562 = vadd.xlane.f32.xlu0 %v561
    %v563 = vpop.xlane.xlu0 %562
    %v564 = vadd.f32 %v492, %v493
    %565 = vadd.xlane.f32.xlu0 %v564
    %v566 = vpop.xlane.xlu0 %565
    %v567 = vadd.f32 %v494, %v495
    %568 = vadd.xlane.f32.xlu0 %v567
    %v569 = vpop.xlane.xlu0 %568
    %v570 = vadd.f32 %v496, %v497
    %571 = vadd.xlane.f32.xlu0 %v570
    %v572 = vpop.xlane.xlu0 %571
    %v573 = vadd.f32 %v498, %v499
    %574 = vadd.xlane.f32.xlu0 %v573
    %v575 = vpop.xlane.xlu0 %574
    %v576 = vadd.f32 %v500, %v501
    %577 = vadd.xlane.f32.xlu0 %v576
    %v578 = vpop.xlane.xlu0 %577
    %v579 = vadd.f32 %v502, %v503
    %580 = vadd.xlane.f32.xlu0 %v579
    %v581 = vpop.xlane.xlu0 %580
    %v582 = vadd.f32 %v504, %v505
    %583 = vadd.xlane.f32.xlu0 %v582
    %v584 = vpop.xlane.xlu0 %583
    %v585 = vadd.f32 %v506, %v507
    %586 = vadd.xlane.f32.xlu0 %v585
    %v587 = vpop.xlane.xlu0 %586
    %v588 = vadd.f32 %v508, %v509
    %589 = vadd.xlane.f32.xlu0 %v588
    %v590 = vpop.xlane.xlu0 %589
    %v591 = vadd.f32 %v510, %v511
    %592 = vadd.xlane.f32.xlu0 %v591
    %v593 = vpop.xlane.xlu0 %592
    %v594 = vadd.f32 %v512, %v513
    %595 = vadd.xlane.f32.xlu0 %v594
    %v596 = vpop.xlane.xlu0 %595
    %v597 = vadd.f32 %v514, %v515
    %598 = vadd.xlane.f32.xlu0 %v597
    %v599 = vpop.xlane.xlu0 %598
    %v600 = vadd.f32 %v516, %v517
    %601 = vadd.xlane.f32.xlu0 %v600
    %v602 = vpop.xlane.xlu0 %601
    %v603 = vadd.f32 %v518, %v519
    %604 = vadd.xlane.f32.xlu0 %v603
    %v605 = vpop.xlane.xlu0 %604
    %v606 = vadd.f32 %v520, %v521
    %607 = vadd.xlane.f32.xlu0 %v606
    %v608 = vpop.xlane.xlu0 %607
    %v609 = vadd.f32 %v522, %v523
    %610 = vadd.xlane.f32.xlu0 %v609
    %v611 = vpop.xlane.xlu0 %610
    %v612 = vadd.f32 %v524, %v525
    %613 = vadd.xlane.f32.xlu0 %v612
    %v614 = vpop.xlane.xlu0 %613
    %v615 = vadd.f32 %v526, %v527
    %616 = vadd.xlane.f32.xlu0 %v615
    %v617 = vpop.xlane.xlu0 %616
    %v618 = vadd.f32 %v528, %v529
    %619 = vadd.xlane.f32.xlu0 %v618
    %v620 = vpop.xlane.xlu0 %619
    %v621 = vadd.f32 %v530, %v531
    %622 = vadd.xlane.f32.xlu0 %v621
    %v623 = vpop.xlane.xlu0 %622
    %v624 = vadd.f32 %v532, %v533
    %625 = vadd.xlane.f32.xlu0 %v624
    %v626 = vpop.xlane.xlu0 %625
    %v627 = vadd.f32 %v534, %v535
    %628 = vadd.xlane.f32.xlu0 %v627
    %v629 = vpop.xlane.xlu0 %628
    %v630 = vadd.f32 %v536, %v537
    %631 = vadd.xlane.f32.xlu0 %v630
    %v632 = vpop.xlane.xlu0 %631
    %v633 = vadd.f32 %v538, %v539
    %634 = vadd.xlane.f32.xlu0 %v633
    %v635 = vpop.xlane.xlu0 %634
    %v636 = vmul.f32 %v542, 0.00390625
    %v637 = vmul.f32 %v545, 0.00390625
    %v638 = vmul.f32 %v548, 0.00390625
    %v639 = vmul.f32 %v551, 0.00390625
    %v640 = vmul.f32 %v554, 0.00390625
    %v641 = vmul.f32 %v557, 0.00390625
    %v642 = vmul.f32 %v560, 0.00390625
    %v643 = vmul.f32 %v563, 0.00390625
    %v644 = vmul.f32 %v566, 0.00390625
    %v645 = vmul.f32 %v569, 0.00390625
    %v646 = vmul.f32 %v572, 0.00390625
    %v647 = vmul.f32 %v575, 0.00390625
    %v648 = vmul.f32 %v578, 0.00390625
    %v649 = vmul.f32 %v581, 0.00390625
    %v650 = vmul.f32 %v584, 0.00390625
    %v651 = vmul.f32 %v587, 0.00390625
    %v652 = vmul.f32 %v590, 0.00390625
    %v653 = vmul.f32 %v593, 0.00390625
    %v654 = vmul.f32 %v596, 0.00390625
    %v655 = vmul.f32 %v599, 0.00390625
    %v656 = vmul.f32 %v602, 0.00390625
    %v657 = vmul.f32 %v605, 0.00390625
    %v658 = vmul.f32 %v608, 0.00390625
    %v659 = vmul.f32 %v611, 0.00390625
    %v660 = vmul.f32 %v614, 0.00390625
    %v661 = vmul.f32 %v617, 0.00390625
    %v662 = vmul.f32 %v620, 0.00390625
    %v663 = vmul.f32 %v623, 0.00390625
    %v664 = vmul.f32 %v626, 0.00390625
    %v665 = vmul.f32 %v629, 0.00390625
    %v666 = vmul.f32 %v632, 0.00390625
    %v667 = vmul.f32 %v635, 0.00390625
    %v668 = vmul.f32 %v444, %v444
    %v669 = vmul.f32 %v445, %v445
    %v670 = vmul.f32 %v446, %v446
    %v671 = vmul.f32 %v447, %v447
    %v672 = vmul.f32 %v448, %v448
    %v673 = vmul.f32 %v449, %v449
    %v674 = vmul.f32 %v450, %v450
    %v675 = vmul.f32 %v451, %v451
    %v676 = vmul.f32 %v452, %v452
    %v677 = vmul.f32 %v453, %v453
    %v678 = vmul.f32 %v454, %v454
    %v679 = vmul.f32 %v455, %v455
    %v680 = vmul.f32 %v456, %v456
    %v681 = vmul.f32 %v457, %v457
    %v682 = vmul.f32 %v458, %v458
    %v683 = vmul.f32 %v459, %v459
    %v684 = vmul.f32 %v460, %v460
    %v685 = vmul.f32 %v461, %v461
    %v686 = vmul.f32 %v462, %v462
    %v687 = vmul.f32 %v463, %v463
    %v688 = vmul.f32 %v464, %v464
    %v689 = vmul.f32 %v465, %v465
    %v690 = vmul.f32 %v466, %v466
    %v691 = vmul.f32 %v467, %v467
    %v692 = vmul.f32 %v468, %v468
    %v693 = vmul.f32 %v469, %v469
    %v694 = vmul.f32 %v470, %v470
    %v695 = vmul.f32 %v471, %v471
    %v696 = vmul.f32 %v472, %v472
    %v697 = vmul.f32 %v473, %v473
    %v698 = vmul.f32 %v474, %v474
    %v699 = vmul.f32 %v475, %v475
    %v700 = vsub.f32 %v636, %v668
    %v701 = vsub.f32 %v637, %v669
    %v702 = vsub.f32 %v638, %v670
    %v703 = vsub.f32 %v639, %v671
    %v704 = vsub.f32 %v640, %v672
    %v705 = vsub.f32 %v641, %v673
    %v706 = vsub.f32 %v642, %v674
    %v707 = vsub.f32 %v643, %v675
    %v708 = vsub.f32 %v644, %v676
    %v709 = vsub.f32 %v645, %v677
    %v710 = vsub.f32 %v646, %v678
    %v711 = vsub.f32 %v647, %v679
    %v712 = vsub.f32 %v648, %v680
    %v713 = vsub.f32 %v649, %v681
    %v714 = vsub.f32 %v650, %v682
    %v715 = vsub.f32 %v651, %v683
    %v716 = vsub.f32 %v652, %v684
    %v717 = vsub.f32 %v653, %v685
    %v718 = vsub.f32 %v654, %v686
    %v719 = vsub.f32 %v655, %v687
    %v720 = vsub.f32 %v656, %v688
    %v721 = vsub.f32 %v657, %v689
    %v722 = vsub.f32 %v658, %v690
    %v723 = vsub.f32 %v659, %v691
    %v724 = vsub.f32 %v660, %v692
    %v725 = vsub.f32 %v661, %v693
    %v726 = vsub.f32 %v662, %v694
    %v727 = vsub.f32 %v663, %v695
    %v728 = vsub.f32 %v664, %v696
    %v729 = vsub.f32 %v665, %v697
    %v730 = vsub.f32 %v666, %v698
    %v731 = vsub.f32 %v667, %v699
    %v732 = vadd.f32 %v700, 1e-05
    %v733 = vadd.f32 %v701, 1e-05
    %v734 = vadd.f32 %v702, 1e-05
    %v735 = vadd.f32 %v703, 1e-05
    %v736 = vadd.f32 %v704, 1e-05
    %v737 = vadd.f32 %v705, 1e-05
    %v738 = vadd.f32 %v706, 1e-05
    %v739 = vadd.f32 %v707, 1e-05
    %v740 = vadd.f32 %v708, 1e-05
    %v741 = vadd.f32 %v709, 1e-05
    %v742 = vadd.f32 %v710, 1e-05
    %v743 = vadd.f32 %v711, 1e-05
    %v744 = vadd.f32 %v712, 1e-05
    %v745 = vadd.f32 %v713, 1e-05
    %v746 = vadd.f32 %v714, 1e-05
    %v747 = vadd.f32 %v715, 1e-05
    %v748 = vadd.f32 %v716, 1e-05
    %v749 = vadd.f32 %v717, 1e-05
    %v750 = vadd.f32 %v718, 1e-05
    %v751 = vadd.f32 %v719, 1e-05
    %v752 = vadd.f32 %v720, 1e-05
    %v753 = vadd.f32 %v721, 1e-05
    %v754 = vadd.f32 %v722, 1e-05
    %v755 = vadd.f32 %v723, 1e-05
    %v756 = vadd.f32 %v724, 1e-05
    %v757 = vadd.f32 %v725, 1e-05
    %v758 = vadd.f32 %v726, 1e-05
    %v759 = vadd.f32 %v727, 1e-05
    %v760 = vadd.f32 %v728, 1e-05
    %v761 = vadd.f32 %v729, 1e-05
    %v762 = vadd.f32 %v730, 1e-05
    %v763 = vadd.f32 %v731, 1e-05
    %v764 = vrsqrt.pop %v732
    %v765 = vrsqrt.pop %v733
    %v766 = vrsqrt.pop %v734
    %v767 = vrsqrt.pop %v735
    %v768 = vrsqrt.pop %v736
    %v769 = vrsqrt.pop %v737
    %v770 = vrsqrt.pop %v738
    %v771 = vrsqrt.pop %v739
    %v772 = vrsqrt.pop %v740
    %v773 = vrsqrt.pop %v741
    %v774 = vrsqrt.pop %v742
    %v775 = vrsqrt.pop %v743
    %v776 = vrsqrt.pop %v744
    %v777 = vrsqrt.pop %v745
    %v778 = vrsqrt.pop %v746
    %v779 = vrsqrt.pop %v747
    %v780 = vrsqrt.pop %v748
    %v781 = vrsqrt.pop %v749
    %v782 = vrsqrt.pop %v750
    %v783 = vrsqrt.pop %v751
    %v784 = vrsqrt.pop %v752
    %v785 = vrsqrt.pop %v753
    %v786 = vrsqrt.pop %v754
    %v787 = vrsqrt.pop %v755
    %v788 = vrsqrt.pop %v756
    %v789 = vrsqrt.pop %v757
    %v790 = vrsqrt.pop %v758
    %v791 = vrsqrt.pop %v759
    %v792 = vrsqrt.pop %v760
    %v793 = vrsqrt.pop %v761
    %v794 = vrsqrt.pop %v762
    %v795 = vrsqrt.pop %v763
    %v796 = vsub.f32 %v190, %v444
    %v797 = vsub.f32 %v192, %v444
    %v798 = vsub.f32 %v194, %v445
    %v799 = vsub.f32 %v196, %v445
    %v800 = vsub.f32 %v200, %v446
    %v801 = vsub.f32 %v202, %v446
    %v802 = vsub.f32 %v204, %v447
    %v803 = vsub.f32 %v206, %v447
    %v804 = vsub.f32 %v210, %v448
    %v805 = vsub.f32 %v212, %v448
    %v806 = vsub.f32 %v214, %v449
    %v807 = vsub.f32 %v216, %v449
    %v808 = vsub.f32 %v220, %v450
    %v809 = vsub.f32 %v222, %v450
    %v810 = vsub.f32 %v224, %v451
    %v811 = vsub.f32 %v226, %v451
    %v812 = vsub.f32 %v230, %v452
    %v813 = vsub.f32 %v232, %v452
    %v814 = vsub.f32 %v234, %v453
    %v815 = vsub.f32 %v236, %v453
    %v816 = vsub.f32 %v240, %v454
    %v817 = vsub.f32 %v242, %v454
    %v818 = vsub.f32 %v244, %v455
    %v819 = vsub.f32 %v246, %v455
    %v820 = vsub.f32 %v250, %v456
    %v821 = vsub.f32 %v252, %v456
    %v822 = vsub.f32 %v254, %v457
    %v823 = vsub.f32 %v256, %v457
    %v824 = vsub.f32 %v260, %v458
    %v825 = vsub.f32 %v262, %v458
    %v826 = vsub.f32 %v264, %v459
    %v827 = vsub.f32 %v266, %v459
    %v828 = vsub.f32 %v270, %v460
    %v829 = vsub.f32 %v272, %v460
    %v830 = vsub.f32 %v274, %v461
    %v831 = vsub.f32 %v276, %v461
    %v832 = vsub.f32 %v280, %v462
    %v833 = vsub.f32 %v282, %v462
    %v834 = vsub.f32 %v284, %v463
    %v835 = vsub.f32 %v286, %v463
    %v836 = vsub.f32 %v290, %v464
    %v837 = vsub.f32 %v292, %v464
    %v838 = vsub.f32 %v294, %v465
    %v839 = vsub.f32 %v296, %v465
    %v840 = vsub.f32 %v300, %v466
    %v841 = vsub.f32 %v302, %v466
    %v842 = vsub.f32 %v304, %v467
    %v843 = vsub.f32 %v306, %v467
    %v844 = vsub.f32 %v310, %v468
    %v845 = vsub.f32 %v312, %v468
    %v846 = vsub.f32 %v314, %v469
    %v847 = vsub.f32 %v316, %v469
    %v848 = vsub.f32 %v320, %v470
    %v849 = vsub.f32 %v322, %v470
    %v850 = vsub.f32 %v324, %v471
    %v851 = vsub.f32 %v326, %v471
    %v852 = vsub.f32 %v330, %v472
    %v853 = vsub.f32 %v332, %v472
    %v854 = vsub.f32 %v334, %v473
    %v855 = vsub.f32 %v336, %v473
    %v856 = vsub.f32 %v340, %v474
    %v857 = vsub.f32 %v342, %v474
    %v858 = vsub.f32 %v344, %v475
    %v859 = vsub.f32 %v346, %v475
    %v860 = vmul.f32 %v796, %v764
    %v861 = vmul.f32 %v797, %v764
    %v862 = vmul.f32 %v798, %v765
    %v863 = vmul.f32 %v799, %v765
    %v864 = vmul.f32 %v800, %v766
    %v865 = vmul.f32 %v801, %v766
    %v866 = vmul.f32 %v802, %v767
    %v867 = vmul.f32 %v803, %v767
    %v868 = vmul.f32 %v804, %v768
    %v869 = vmul.f32 %v805, %v768
    %v870 = vmul.f32 %v806, %v769
    %v871 = vmul.f32 %v807, %v769
    %v872 = vmul.f32 %v808, %v770
    %v873 = vmul.f32 %v809, %v770
    %v874 = vmul.f32 %v810, %v771
    %v875 = vmul.f32 %v811, %v771
    %v876 = vmul.f32 %v812, %v772
    %v877 = vmul.f32 %v813, %v772
    %v878 = vmul.f32 %v814, %v773
    %v879 = vmul.f32 %v815, %v773
    %v880 = vmul.f32 %v816, %v774
    %v881 = vmul.f32 %v817, %v774
    %v882 = vmul.f32 %v818, %v775
    %v883 = vmul.f32 %v819, %v775
    %v884 = vmul.f32 %v820, %v776
    %v885 = vmul.f32 %v821, %v776
    %v886 = vmul.f32 %v822, %v777
    %v887 = vmul.f32 %v823, %v777
    %v888 = vmul.f32 %v824, %v778
    %v889 = vmul.f32 %v825, %v778
    %v890 = vmul.f32 %v826, %v779
    %v891 = vmul.f32 %v827, %v779
    %v892 = vmul.f32 %v828, %v780
    %v893 = vmul.f32 %v829, %v780
    %v894 = vmul.f32 %v830, %v781
    %v895 = vmul.f32 %v831, %v781
    %v896 = vmul.f32 %v832, %v782
    %v897 = vmul.f32 %v833, %v782
    %v898 = vmul.f32 %v834, %v783
    %v899 = vmul.f32 %v835, %v783
    %v900 = vmul.f32 %v836, %v784
    %v901 = vmul.f32 %v837, %v784
    %v902 = vmul.f32 %v838, %v785
    %v903 = vmul.f32 %v839, %v785
    %v904 = vmul.f32 %v840, %v786
    %v905 = vmul.f32 %v841, %v786
    %v906 = vmul.f32 %v842, %v787
    %v907 = vmul.f32 %v843, %v787
    %v908 = vmul.f32 %v844, %v788
    %v909 = vmul.f32 %v845, %v788
    %v910 = vmul.f32 %v846, %v789
    %v911 = vmul.f32 %v847, %v789
    %v912 = vmul.f32 %v848, %v790
    %v913 = vmul.f32 %v849, %v790
    %v914 = vmul.f32 %v850, %v791
    %v915 = vmul.f32 %v851, %v791
    %v916 = vmul.f32 %v852, %v792
    %v917 = vmul.f32 %v853, %v792
    %v918 = vmul.f32 %v854, %v793
    %v919 = vmul.f32 %v855, %v793
    %v920 = vmul.f32 %v856, %v794
    %v921 = vmul.f32 %v857, %v794
    %v922 = vmul.f32 %v858, %v795
    %v923 = vmul.f32 %v859, %v795
    %v924 = vlaneseq
    %v925 = vshrl.u32 %v924, 7
    %v926 = vsub.s32 1, %v925
    %v927 = vrot.slane %v36, %v926
    %v928 = vlaneseq
    %v929 = vshrl.u32 %v928, 7
    %v930 = vsub.s32 1, %v929
    %v931 = vrot.slane %v37, %v930
    %v932 = vmul.f32 %v860, %v927
    %v933 = vmul.f32 %v861, %v931
    %v934 = vmul.f32 %v862, %v927
    %v935 = vmul.f32 %v863, %v931
    %v936 = vmul.f32 %v864, %v927
    %v937 = vmul.f32 %v865, %v931
    %v938 = vmul.f32 %v866, %v927
    %v939 = vmul.f32 %v867, %v931
    %v940 = vmul.f32 %v868, %v927
    %v941 = vmul.f32 %v869, %v931
    %v942 = vmul.f32 %v870, %v927
    %v943 = vmul.f32 %v871, %v931
    %v944 = vmul.f32 %v872, %v927
    %v945 = vmul.f32 %v873, %v931
    %v946 = vmul.f32 %v874, %v927
    %v947 = vmul.f32 %v875, %v931
    %v948 = vmul.f32 %v876, %v927
    %v949 = vmul.f32 %v877, %v931
    %v950 = vmul.f32 %v878, %v927
    %v951 = vmul.f32 %v879, %v931
    %v952 = vmul.f32 %v880, %v927
    %v953 = vmul.f32 %v881, %v931
    %v954 = vmul.f32 %v882, %v927
    %v955 = vmul.f32 %v883, %v931
    %v956 = vmul.f32 %v884, %v927
    %v957 = vmul.f32 %v885, %v931
    %v958 = vmul.f32 %v886, %v927
    %v959 = vmul.f32 %v887, %v931
    %v960 = vmul.f32 %v888, %v927
    %v961 = vmul.f32 %v889, %v931
    %v962 = vmul.f32 %v890, %v927
    %v963 = vmul.f32 %v891, %v931
    %v964 = vmul.f32 %v892, %v927
    %v965 = vmul.f32 %v893, %v931
    %v966 = vmul.f32 %v894, %v927
    %v967 = vmul.f32 %v895, %v931
    %v968 = vmul.f32 %v896, %v927
    %v969 = vmul.f32 %v897, %v931
    %v970 = vmul.f32 %v898, %v927
    %v971 = vmul.f32 %v899, %v931
    %v972 = vmul.f32 %v900, %v927
    %v973 = vmul.f32 %v901, %v931
    %v974 = vmul.f32 %v902, %v927
    %v975 = vmul.f32 %v903, %v931
    %v976 = vmul.f32 %v904, %v927
    %v977 = vmul.f32 %v905, %v931
    %v978 = vmul.f32 %v906, %v927
    %v979 = vmul.f32 %v907, %v931
    %v980 = vmul.f32 %v908, %v927
    %v981 = vmul.f32 %v909, %v931
    %v982 = vmul.f32 %v910, %v927
    %v983 = vmul.f32 %v911, %v931
    %v984 = vmul.f32 %v912, %v927
    %v985 = vmul.f32 %v913, %v931
    %v986 = vmul.f32 %v914, %v927
    %v987 = vmul.f32 %v915, %v931
    %v988 = vmul.f32 %v916, %v927
    %v989 = vmul.f32 %v917, %v931
    %v990 = vmul.f32 %v918, %v927
    %v991 = vmul.f32 %v919, %v931
    %v992 = vmul.f32 %v920, %v927
    %v993 = vmul.f32 %v921, %v931
    %v994 = vmul.f32 %v922, %v927
    %v995 = vmul.f32 %v923, %v931
    %v996 = vlaneseq
    %v997 = vshrl.u32 %v996, 7
    %v998 = vsub.s32 2, %v997
    %v999 = vrot.slane %v36, %v998
    %v1000 = vlaneseq
    %v1001 = vshrl.u32 %v1000, 7
    %v1002 = vsub.s32 2, %v1001
    %v1003 = vrot.slane %v37, %v1002
    %v1004 = vadd.f32 %v932, %v999
    %v1005 = vadd.f32 %v933, %v1003
    %v1006 = vadd.f32 %v934, %v999
    %v1007 = vadd.f32 %v935, %v1003
    %v1008 = vadd.f32 %v936, %v999
    %v1009 = vadd.f32 %v937, %v1003
    %v1010 = vadd.f32 %v938, %v999
    %v1011 = vadd.f32 %v939, %v1003
    %v1012 = vadd.f32 %v940, %v999
    %v1013 = vadd.f32 %v941, %v1003
    %v1014 = vadd.f32 %v942, %v999
    %v1015 = vadd.f32 %v943, %v1003
    %v1016 = vadd.f32 %v944, %v999
    %v1017 = vadd.f32 %v945, %v1003
    %v1018 = vadd.f32 %v946, %v999
    %v1019 = vadd.f32 %v947, %v1003
    %v1020 = vadd.f32 %v948, %v999
    %v1021 = vadd.f32 %v949, %v1003
    %v1022 = vadd.f32 %v950, %v999
    %v1023 = vadd.f32 %v951, %v1003
    %v1024 = vadd.f32 %v952, %v999
    %v1025 = vadd.f32 %v953, %v1003
    %v1026 = vadd.f32 %v954, %v999
    %v1027 = vadd.f32 %v955, %v1003
    %v1028 = vadd.f32 %v956, %v999
    %v1029 = vadd.f32 %v957, %v1003
    %v1030 = vadd.f32 %v958, %v999
    %v1031 = vadd.f32 %v959, %v1003
    %v1032 = vadd.f32 %v960, %v999
    %v1033 = vadd.f32 %v961, %v1003
    %v1034 = vadd.f32 %v962, %v999
    %v1035 = vadd.f32 %v963, %v1003
    %v1036 = vadd.f32 %v964, %v999
    %v1037 = vadd.f32 %v965, %v1003
    %v1038 = vadd.f32 %v966, %v999
    %v1039 = vadd.f32 %v967, %v1003
    %v1040 = vadd.f32 %v968, %v999
    %v1041 = vadd.f32 %v969, %v1003
    %v1042 = vadd.f32 %v970, %v999
    %v1043 = vadd.f32 %v971, %v1003
    %v1044 = vadd.f32 %v972, %v999
    %v1045 = vadd.f32 %v973, %v1003
    %v1046 = vadd.f32 %v974, %v999
    %v1047 = vadd.f32 %v975, %v1003
    %v1048 = vadd.f32 %v976, %v999
    %v1049 = vadd.f32 %v977, %v1003
    %v1050 = vadd.f32 %v978, %v999
    %v1051 = vadd.f32 %v979, %v1003
    %v1052 = vadd.f32 %v980, %v999
    %v1053 = vadd.f32 %v981, %v1003
    %v1054 = vadd.f32 %v982, %v999
    %v1055 = vadd.f32 %v983, %v1003
    %v1056 = vadd.f32 %v984, %v999
    %v1057 = vadd.f32 %v985, %v1003
    %v1058 = vadd.f32 %v986, %v999
    %v1059 = vadd.f32 %v987, %v1003
    %v1060 = vadd.f32 %v988, %v999
    %v1061 = vadd.f32 %v989, %v1003
    %v1062 = vadd.f32 %v990, %v999
    %v1063 = vadd.f32 %v991, %v1003
    %v1064 = vadd.f32 %v992, %v999
    %v1065 = vadd.f32 %v993, %v1003
    %v1066 = vadd.f32 %v994, %v999
    %v1067 = vadd.f32 %v995, %v1003
    %v1068 = vmax.f32 %v1004, 0.0
    %v1069 = vmax.f32 %v1005, 0.0
    %v1070 = vmax.f32 %v1006, 0.0
    %v1071 = vmax.f32 %v1007, 0.0
    %v1072 = vmax.f32 %v1008, 0.0
    %v1073 = vmax.f32 %v1009, 0.0
    %v1074 = vmax.f32 %v1010, 0.0
    %v1075 = vmax.f32 %v1011, 0.0
    %v1076 = vmax.f32 %v1012, 0.0
    %v1077 = vmax.f32 %v1013, 0.0
    %v1078 = vmax.f32 %v1014, 0.0
    %v1079 = vmax.f32 %v1015, 0.0
    %v1080 = vmax.f32 %v1016, 0.0
    %v1081 = vmax.f32 %v1017, 0.0
    %v1082 = vmax.f32 %v1018, 0.0
    %v1083 = vmax.f32 %v1019, 0.0
    %v1084 = vmax.f32 %v1020, 0.0
    %v1085 = vmax.f32 %v1021, 0.0
    %v1086 = vmax.f32 %v1022, 0.0
    %v1087 = vmax.f32 %v1023, 0.0
    %v1088 = vmax.f32 %v1024, 0.0
    %v1089 = vmax.f32 %v1025, 0.0
    %v1090 = vmax.f32 %v1026, 0.0
    %v1091 = vmax.f32 %v1027, 0.0
    %v1092 = vmax.f32 %v1028, 0.0
    %v1093 = vmax.f32 %v1029, 0.0
    %v1094 = vmax.f32 %v1030, 0.0
    %v1095 = vmax.f32 %v1031, 0.0
    %v1096 = vmax.f32 %v1032, 0.0
    %v1097 = vmax.f32 %v1033, 0.0
    %v1098 = vmax.f32 %v1034, 0.0
    %v1099 = vmax.f32 %v1035, 0.0
    %v1100 = vmax.f32 %v1036, 0.0
    %v1101 = vmax.f32 %v1037, 0.0
    %v1102 = vmax.f32 %v1038, 0.0
    %v1103 = vmax.f32 %v1039, 0.0
    %v1104 = vmax.f32 %v1040, 0.0
    %v1105 = vmax.f32 %v1041, 0.0
    %v1106 = vmax.f32 %v1042, 0.0
    %v1107 = vmax.f32 %v1043, 0.0
    %v1108 = vmax.f32 %v1044, 0.0
    %v1109 = vmax.f32 %v1045, 0.0
    %v1110 = vmax.f32 %v1046, 0.0
    %v1111 = vmax.f32 %v1047, 0.0
    %v1112 = vmax.f32 %v1048, 0.0
    %v1113 = vmax.f32 %v1049, 0.0
    %v1114 = vmax.f32 %v1050, 0.0
    %v1115 = vmax.f32 %v1051, 0.0
    %v1116 = vmax.f32 %v1052, 0.0
    %v1117 = vmax.f32 %v1053, 0.0
    %v1118 = vmax.f32 %v1054, 0.0
    %v1119 = vmax.f32 %v1055, 0.0
    %v1120 = vmax.f32 %v1056, 0.0
    %v1121 = vmax.f32 %v1057, 0.0
    %v1122 = vmax.f32 %v1058, 0.0
    %v1123 = vmax.f32 %v1059, 0.0
    %v1124 = vmax.f32 %v1060, 0.0
    %v1125 = vmax.f32 %v1061, 0.0
    %v1126 = vmax.f32 %v1062, 0.0
    %v1127 = vmax.f32 %v1063, 0.0
    %v1128 = vmax.f32 %v1064, 0.0
    %v1129 = vmax.f32 %v1065, 0.0
    %v1130 = vmax.f32 %v1066, 0.0
    %v1131 = vmax.f32 %v1067, 0.0
    %v1132 = vpack.c.bf16 %v1070, %v1068
    %v1133 = vpack.c.bf16 %v1071, %v1069
    %v1134 = vpack.c.bf16 %v1074, %v1072
    %v1135 = vpack.c.bf16 %v1075, %v1073
    %v1136 = vpack.c.bf16 %v1078, %v1076
    %v1137 = vpack.c.bf16 %v1079, %v1077
    %v1138 = vpack.c.bf16 %v1082, %v1080
    %v1139 = vpack.c.bf16 %v1083, %v1081
    %v1140 = vpack.c.bf16 %v1086, %v1084
    %v1141 = vpack.c.bf16 %v1087, %v1085
    %v1142 = vpack.c.bf16 %v1090, %v1088
    %v1143 = vpack.c.bf16 %v1091, %v1089
    %v1144 = vpack.c.bf16 %v1094, %v1092
    %v1145 = vpack.c.bf16 %v1095, %v1093
    %v1146 = vpack.c.bf16 %v1098, %v1096
    %v1147 = vpack.c.bf16 %v1099, %v1097
    %v1148 = vpack.c.bf16 %v1102, %v1100
    %v1149 = vpack.c.bf16 %v1103, %v1101
    %v1150 = vpack.c.bf16 %v1106, %v1104
    %v1151 = vpack.c.bf16 %v1107, %v1105
    %v1152 = vpack.c.bf16 %v1110, %v1108
    %v1153 = vpack.c.bf16 %v1111, %v1109
    %v1154 = vpack.c.bf16 %v1114, %v1112
    %v1155 = vpack.c.bf16 %v1115, %v1113
    %v1156 = vpack.c.bf16 %v1118, %v1116
    %v1157 = vpack.c.bf16 %v1119, %v1117
    %v1158 = vpack.c.bf16 %v1122, %v1120
    %v1159 = vpack.c.bf16 %v1123, %v1121
    %v1160 = vpack.c.bf16 %v1126, %v1124
    %v1161 = vpack.c.bf16 %v1127, %v1125
    %v1162 = vpack.c.bf16 %v1130, %v1128
    %v1163 = vpack.c.bf16 %v1131, %v1129
    %v1164 = vld [vmem:[%s2] sm:$0xff]
    %v1165 = vld [vmem:[%s2 + $0x8] sm:$0xff]
    %v1166 = vld [vmem:[%s2 + $0x10] sm:$0xff]
    %v1167 = vld [vmem:[%s2 + $0x18] sm:$0xff]
    %v1168 = vld [vmem:[%s2 + $0x20] sm:$0xff]
    %v1169 = vld [vmem:[%s2 + $0x28] sm:$0xff]
    %v1170 = vld [vmem:[%s2 + $0x30] sm:$0xff]
    %v1171 = vld [vmem:[%s2 + $0x38] sm:$0xff]
    %v1172 = vld [vmem:[%s2 + $0x40] sm:$0xff]
    %v1173 = vld [vmem:[%s2 + $0x48] sm:$0xff]
    %v1174 = vld [vmem:[%s2 + $0x50] sm:$0xff]
    %v1175 = vld [vmem:[%s2 + $0x58] sm:$0xff]
    %v1176 = vld [vmem:[%s2 + $0x60] sm:$0xff]
    %v1177 = vld [vmem:[%s2 + $0x68] sm:$0xff]
    %v1178 = vld [vmem:[%s2 + $0x70] sm:$0xff]
    %v1179 = vld [vmem:[%s2 + $0x78] sm:$0xff]
    %v1180 = vld [vmem:[%s2 + $0x80] sm:$0xff]
    %v1181 = vld [vmem:[%s2 + $0x88] sm:$0xff]
    %v1182 = vld [vmem:[%s2 + $0x90] sm:$0xff]
    %v1183 = vld [vmem:[%s2 + $0x98] sm:$0xff]
    %v1184 = vld [vmem:[%s2 + $0xa0] sm:$0xff]
    %v1185 = vld [vmem:[%s2 + $0xa8] sm:$0xff]
    %v1186 = vld [vmem:[%s2 + $0xb0] sm:$0xff]
    %v1187 = vld [vmem:[%s2 + $0xb8] sm:$0xff]
    %v1188 = vld [vmem:[%s2 + $0xc0] sm:$0xff]
    %v1189 = vld [vmem:[%s2 + $0xc8] sm:$0xff]
    %v1190 = vld [vmem:[%s2 + $0xd0] sm:$0xff]
    %v1191 = vld [vmem:[%s2 + $0xd8] sm:$0xff]
    %v1192 = vld [vmem:[%s2 + $0xe0] sm:$0xff]
    %v1193 = vld [vmem:[%s2 + $0xe8] sm:$0xff]
    %v1194 = vld [vmem:[%s2 + $0xf0] sm:$0xff]
    %v1195 = vld [vmem:[%s2 + $0xf8] sm:$0xff]
    %v1196 = vlaneseq
    %v1197 = vshrl.u32 %v1196, 7
    %v1198 = vsub.s32 3, %v1197
    %v1199 = vrot.slane %v36, %v1198
    %v1200 = vlaneseq
    %v1201 = vshrl.u32 %v1200, 7
    %v1202 = vsub.s32 3, %v1201
    %v1203 = vrot.slane %v37, %v1202
    %v1236 = vunpack.c.l.b16 %v1164
    %v1237 = vunpack.c.h.b16 %v1164
    %v1238 = vunpack.c.l.b16 %v1165
    %v1239 = vunpack.c.h.b16 %v1165
    %v1240 = vunpack.c.l.b16 %v1166
    %v1241 = vunpack.c.h.b16 %v1166
    %v1242 = vunpack.c.l.b16 %v1167
    %v1243 = vunpack.c.h.b16 %v1167
    %v1244 = vunpack.c.l.b16 %v1168
    %v1245 = vunpack.c.h.b16 %v1168
    %v1246 = vunpack.c.l.b16 %v1169
    %v1247 = vunpack.c.h.b16 %v1169
    %v1248 = vunpack.c.l.b16 %v1170
    %v1249 = vunpack.c.h.b16 %v1170
    %v1250 = vunpack.c.l.b16 %v1171
    %v1251 = vunpack.c.h.b16 %v1171
    %v1252 = vunpack.c.l.b16 %v1172
    %v1253 = vunpack.c.h.b16 %v1172
    %v1254 = vunpack.c.l.b16 %v1173
    %v1255 = vunpack.c.h.b16 %v1173
    %v1256 = vunpack.c.l.b16 %v1174
    %v1257 = vunpack.c.h.b16 %v1174
    %v1258 = vunpack.c.l.b16 %v1175
    %v1259 = vunpack.c.h.b16 %v1175
    %v1260 = vunpack.c.l.b16 %v1176
    %v1261 = vunpack.c.h.b16 %v1176
    %v1262 = vunpack.c.l.b16 %v1177
    %v1263 = vunpack.c.h.b16 %v1177
    %v1264 = vunpack.c.l.b16 %v1178
    %v1265 = vunpack.c.h.b16 %v1178
    %v1266 = vunpack.c.l.b16 %v1179
    %v1267 = vunpack.c.h.b16 %v1179
    %v1268 = vunpack.c.l.b16 %v1180
    %v1269 = vunpack.c.h.b16 %v1180
    %v1270 = vunpack.c.l.b16 %v1181
    %v1271 = vunpack.c.h.b16 %v1181
    %v1272 = vunpack.c.l.b16 %v1182
    %v1273 = vunpack.c.h.b16 %v1182
    %v1274 = vunpack.c.l.b16 %v1183
    %v1275 = vunpack.c.h.b16 %v1183
    %v1276 = vunpack.c.l.b16 %v1184
    %v1277 = vunpack.c.h.b16 %v1184
    %v1278 = vunpack.c.l.b16 %v1185
    %v1279 = vunpack.c.h.b16 %v1185
    %v1280 = vunpack.c.l.b16 %v1186
    %v1281 = vunpack.c.h.b16 %v1186
    %v1282 = vunpack.c.l.b16 %v1187
    %v1283 = vunpack.c.h.b16 %v1187
    %v1284 = vunpack.c.l.b16 %v1188
    %v1285 = vunpack.c.h.b16 %v1188
    %v1286 = vunpack.c.l.b16 %v1189
    %v1287 = vunpack.c.h.b16 %v1189
    %v1288 = vunpack.c.l.b16 %v1190
    %v1289 = vunpack.c.h.b16 %v1190
    %v1290 = vunpack.c.l.b16 %v1191
    %v1291 = vunpack.c.h.b16 %v1191
    %v1292 = vunpack.c.l.b16 %v1192
    %v1293 = vunpack.c.h.b16 %v1192
    %v1294 = vunpack.c.l.b16 %v1193
    %v1295 = vunpack.c.h.b16 %v1193
    %v1296 = vunpack.c.l.b16 %v1194
    %v1297 = vunpack.c.h.b16 %v1194
    %v1298 = vunpack.c.l.b16 %v1195
    %v1299 = vunpack.c.h.b16 %v1195
    %v1300 = vpack.c.b16 %v1238, %v1236
    %v1301 = vpack.c.b16 %v1239, %v1237
    %v1302 = vpack.c.b16 %v1242, %v1240
    %v1303 = vpack.c.b16 %v1243, %v1241
    %v1304 = vpack.c.b16 %v1246, %v1244
    %v1305 = vpack.c.b16 %v1247, %v1245
    %v1306 = vpack.c.b16 %v1250, %v1248
    %v1307 = vpack.c.b16 %v1251, %v1249
    %v1308 = vpack.c.b16 %v1254, %v1252
    %v1309 = vpack.c.b16 %v1255, %v1253
    %v1310 = vpack.c.b16 %v1258, %v1256
    %v1311 = vpack.c.b16 %v1259, %v1257
    %v1312 = vpack.c.b16 %v1262, %v1260
    %v1313 = vpack.c.b16 %v1263, %v1261
    %v1314 = vpack.c.b16 %v1266, %v1264
    %v1315 = vpack.c.b16 %v1267, %v1265
    %v1316 = vpack.c.b16 %v1270, %v1268
    %v1317 = vpack.c.b16 %v1271, %v1269
    %v1318 = vpack.c.b16 %v1274, %v1272
    %v1319 = vpack.c.b16 %v1275, %v1273
    %v1320 = vpack.c.b16 %v1278, %v1276
    %v1321 = vpack.c.b16 %v1279, %v1277
    %v1322 = vpack.c.b16 %v1282, %v1280
    %v1323 = vpack.c.b16 %v1283, %v1281
    %v1324 = vpack.c.b16 %v1286, %v1284
    %v1325 = vpack.c.b16 %v1287, %v1285
    %v1326 = vpack.c.b16 %v1290, %v1288
    %v1327 = vpack.c.b16 %v1291, %v1289
    %v1328 = vpack.c.b16 %v1294, %v1292
    %v1329 = vpack.c.b16 %v1295, %v1293
    %v1330 = vpack.c.b16 %v1298, %v1296
    %v1331 = vpack.c.b16 %v1299, %v1297
    %1364 = vmatprep.subr.bf16.mxu0 %v1301
    %1365 = vmatpush1.bf16.msra.mxu0 %v1300
    %1366 = vmatprep.subr.bf16.mxu0 %v1303
    %1367 = vmatpush1.bf16.msra.mxu0 %v1302
    %1368 = vmatprep.subr.bf16.mxu0 %v1305
    %1369 = vmatpush1.bf16.msra.mxu0 %v1304
    %1370 = vmatprep.subr.bf16.mxu0 %v1307
    %1371 = vmatpush1.bf16.msra.mxu0 %v1306
    %1372 = vmatprep.subr.bf16.mxu0 %v1309
    %1373 = vmatpush1.bf16.msra.mxu0 %v1308
    %1374 = vmatprep.subr.bf16.mxu0 %v1311
    %1375 = vmatpush1.bf16.msra.mxu0 %v1310
    %1376 = vmatprep.subr.bf16.mxu0 %v1313
    %1377 = vmatpush1.bf16.msra.mxu0 %v1312
    %1378 = vmatprep.subr.bf16.mxu0 %v1315
    %1379 = vmatpush1.bf16.msra.mxu0 %v1314
    %1380 = vmatprep.subr.bf16.mxu0 %v1317
    %1381 = vmatpush1.bf16.msra.mxu0 %v1316
    %1382 = vmatprep.subr.bf16.mxu0 %v1319
    %1383 = vmatpush1.bf16.msra.mxu0 %v1318
    %1384 = vmatprep.subr.bf16.mxu0 %v1321
    %1385 = vmatpush1.bf16.msra.mxu0 %v1320
    %1386 = vmatprep.subr.bf16.mxu0 %v1323
    %1387 = vmatpush1.bf16.msra.mxu0 %v1322
    %1388 = vmatprep.subr.bf16.mxu0 %v1325
    %1389 = vmatpush1.bf16.msra.mxu0 %v1324
    %1390 = vmatprep.subr.bf16.mxu0 %v1327
    %1391 = vmatpush1.bf16.msra.mxu0 %v1326
    %1392 = vmatprep.subr.bf16.mxu0 %v1329
    %1393 = vmatpush1.bf16.msra.mxu0 %v1328
    %1394 = vmatprep.subr.bf16.mxu0 %v1331
    %1395 = vmatpush1.bf16.msra.mxu0 %v1330
    %1396 = vmatprep.mubr.bf16.mxu0 %v1133
    %1397 = vmatmul.mubr.bf16.gmra.mrb[0].mxu0 %v1132
    %v1398 = vpop.f32.mrb[0].mxu0
    %v1399 = vadd.f32 %v1199, %v1398
    %v1400 = vpop.f32.mrb[0].mxu0
    %v1401 = vadd.f32 %v1203, %v1400
    %v1402 = vpop.f32.mrb[0].mxu0
    %v1403 = vadd.f32 %v1199, %v1402
    %v1404 = vpop.f32.mrb[0].mxu0
    %v1405 = vadd.f32 %v1203, %v1404
    %1406 = vmatprep.mubr.bf16.mxu0 %v1135
    %1407 = vmatmul.mubr.bf16.gmra.mrb[0].mxu0 %v1134
    %v1408 = vpop.f32.mrb[0].mxu0
    %v1409 = vadd.f32 %v1199, %v1408
    %v1410 = vpop.f32.mrb[0].mxu0
    %v1411 = vadd.f32 %v1203, %v1410
    %v1412 = vpop.f32.mrb[0].mxu0
    %v1413 = vadd.f32 %v1199, %v1412
    %v1414 = vpop.f32.mrb[0].mxu0
    %v1415 = vadd.f32 %v1203, %v1414
    %1416 = vmatprep.mubr.bf16.mxu0 %v1137
    %1417 = vmatmul.mubr.bf16.gmra.mrb[0].mxu0 %v1136
    %v1418 = vpop.f32.mrb[0].mxu0
    %v1419 = vadd.f32 %v1199, %v1418
    %v1420 = vpop.f32.mrb[0].mxu0
    %v1421 = vadd.f32 %v1203, %v1420
    %v1422 = vpop.f32.mrb[0].mxu0
    %v1423 = vadd.f32 %v1199, %v1422
    %v1424 = vpop.f32.mrb[0].mxu0
    %v1425 = vadd.f32 %v1203, %v1424
    %1426 = vmatprep.mubr.bf16.mxu0 %v1139
    %1427 = vmatmul.mubr.bf16.gmra.mrb[0].mxu0 %v1138
    %v1428 = vpop.f32.mrb[0].mxu0
    %v1429 = vadd.f32 %v1199, %v1428
    %v1430 = vpop.f32.mrb[0].mxu0
    %v1431 = vadd.f32 %v1203, %v1430
    %v1432 = vpop.f32.mrb[0].mxu0
    %v1433 = vadd.f32 %v1199, %v1432
    %v1434 = vpop.f32.mrb[0].mxu0
    %v1435 = vadd.f32 %v1203, %v1434
    %1436 = vmatprep.mubr.bf16.mxu0 %v1141
    %1437 = vmatmul.mubr.bf16.gmra.mrb[0].mxu0 %v1140
    %v1438 = vpop.f32.mrb[0].mxu0
    %v1439 = vadd.f32 %v1199, %v1438
    %v1440 = vpop.f32.mrb[0].mxu0
    %v1441 = vadd.f32 %v1203, %v1440
    %v1442 = vpop.f32.mrb[0].mxu0
    %v1443 = vadd.f32 %v1199, %v1442
    %v1444 = vpop.f32.mrb[0].mxu0
    %v1445 = vadd.f32 %v1203, %v1444
    %1446 = vmatprep.mubr.bf16.mxu0 %v1143
    %1447 = vmatmul.mubr.bf16.gmra.mrb[0].mxu0 %v1142
    %v1448 = vpop.f32.mrb[0].mxu0
    %v1449 = vadd.f32 %v1199, %v1448
    %v1450 = vpop.f32.mrb[0].mxu0
    %v1451 = vadd.f32 %v1203, %v1450
    %v1452 = vpop.f32.mrb[0].mxu0
    %v1453 = vadd.f32 %v1199, %v1452
    %v1454 = vpop.f32.mrb[0].mxu0
    %v1455 = vadd.f32 %v1203, %v1454
    %1456 = vmatprep.mubr.bf16.mxu0 %v1145
    %1457 = vmatmul.mubr.bf16.gmra.mrb[0].mxu0 %v1144
    %v1458 = vpop.f32.mrb[0].mxu0
    %v1459 = vadd.f32 %v1199, %v1458
    %v1460 = vpop.f32.mrb[0].mxu0
    %v1461 = vadd.f32 %v1203, %v1460
    %v1462 = vpop.f32.mrb[0].mxu0
    %v1463 = vadd.f32 %v1199, %v1462
    %v1464 = vpop.f32.mrb[0].mxu0
    %v1465 = vadd.f32 %v1203, %v1464
    %1466 = vmatprep.mubr.bf16.mxu0 %v1147
    %1467 = vmatmul.mubr.bf16.gmra.mrb[0].mxu0 %v1146
    %v1468 = vpop.f32.mrb[0].mxu0
    %v1469 = vadd.f32 %v1199, %v1468
    %v1470 = vpop.f32.mrb[0].mxu0
    %v1471 = vadd.f32 %v1203, %v1470
    %v1472 = vpop.f32.mrb[0].mxu0
    %v1473 = vadd.f32 %v1199, %v1472
    %v1474 = vpop.f32.mrb[0].mxu0
    %v1475 = vadd.f32 %v1203, %v1474
    %1476 = vmatprep.mubr.bf16.mxu0 %v1149
    %1477 = vmatmul.mubr.bf16.gmra.mrb[0].mxu0 %v1148
    %v1478 = vpop.f32.mrb[0].mxu0
    %v1479 = vadd.f32 %v1199, %v1478
    %v1480 = vpop.f32.mrb[0].mxu0
    %v1481 = vadd.f32 %v1203, %v1480
    %v1482 = vpop.f32.mrb[0].mxu0
    %v1483 = vadd.f32 %v1199, %v1482
    %v1484 = vpop.f32.mrb[0].mxu0
    %v1485 = vadd.f32 %v1203, %v1484
    %1486 = vmatprep.mubr.bf16.mxu0 %v1151
    %1487 = vmatmul.mubr.bf16.gmra.mrb[0].mxu0 %v1150
    %v1488 = vpop.f32.mrb[0].mxu0
    %v1489 = vadd.f32 %v1199, %v1488
    %v1490 = vpop.f32.mrb[0].mxu0
    %v1491 = vadd.f32 %v1203, %v1490
    %v1492 = vpop.f32.mrb[0].mxu0
    %v1493 = vadd.f32 %v1199, %v1492
    %v1494 = vpop.f32.mrb[0].mxu0
    %v1495 = vadd.f32 %v1203, %v1494
    %1496 = vmatprep.mubr.bf16.mxu0 %v1153
    %1497 = vmatmul.mubr.bf16.gmra.mrb[0].mxu0 %v1152
    %v1498 = vpop.f32.mrb[0].mxu0
    %v1499 = vadd.f32 %v1199, %v1498
    %v1500 = vpop.f32.mrb[0].mxu0
    %v1501 = vadd.f32 %v1203, %v1500
    %v1502 = vpop.f32.mrb[0].mxu0
    %v1503 = vadd.f32 %v1199, %v1502
    %v1504 = vpop.f32.mrb[0].mxu0
    %v1505 = vadd.f32 %v1203, %v1504
    %1506 = vmatprep.mubr.bf16.mxu0 %v1155
    %1507 = vmatmul.mubr.bf16.gmra.mrb[0].mxu0 %v1154
    %v1508 = vpop.f32.mrb[0].mxu0
    %v1509 = vadd.f32 %v1199, %v1508
    %v1510 = vpop.f32.mrb[0].mxu0
    %v1511 = vadd.f32 %v1203, %v1510
    %v1512 = vpop.f32.mrb[0].mxu0
    %v1513 = vadd.f32 %v1199, %v1512
    %v1514 = vpop.f32.mrb[0].mxu0
    %v1515 = vadd.f32 %v1203, %v1514
    %1516 = vmatprep.mubr.bf16.mxu0 %v1157
    %1517 = vmatmul.mubr.bf16.gmra.mrb[0].mxu0 %v1156
    %v1518 = vpop.f32.mrb[0].mxu0
    %v1519 = vadd.f32 %v1199, %v1518
    %v1520 = vpop.f32.mrb[0].mxu0
    %v1521 = vadd.f32 %v1203, %v1520
    %v1522 = vpop.f32.mrb[0].mxu0
    %v1523 = vadd.f32 %v1199, %v1522
    %v1524 = vpop.f32.mrb[0].mxu0
    %v1525 = vadd.f32 %v1203, %v1524
    %1526 = vmatprep.mubr.bf16.mxu0 %v1159
    %1527 = vmatmul.mubr.bf16.gmra.mrb[0].mxu0 %v1158
    %v1528 = vpop.f32.mrb[0].mxu0
    %v1529 = vadd.f32 %v1199, %v1528
    %v1530 = vpop.f32.mrb[0].mxu0
    %v1531 = vadd.f32 %v1203, %v1530
    %v1532 = vpop.f32.mrb[0].mxu0
    %v1533 = vadd.f32 %v1199, %v1532
    %v1534 = vpop.f32.mrb[0].mxu0
    %v1535 = vadd.f32 %v1203, %v1534
    %1536 = vmatprep.mubr.bf16.mxu0 %v1161
    %1537 = vmatmul.mubr.bf16.gmra.mrb[0].mxu0 %v1160
    %v1538 = vpop.f32.mrb[0].mxu0
    %v1539 = vadd.f32 %v1199, %v1538
    %v1540 = vpop.f32.mrb[0].mxu0
    %v1541 = vadd.f32 %v1203, %v1540
    %v1542 = vpop.f32.mrb[0].mxu0
    %v1543 = vadd.f32 %v1199, %v1542
    %v1544 = vpop.f32.mrb[0].mxu0
    %v1545 = vadd.f32 %v1203, %v1544
    %1546 = vmatprep.mubr.bf16.mxu0 %v1163
    %1547 = vmatmul.mubr.bf16.gmra.mrb[0].mxu0 %v1162
    %v1548 = vpop.f32.mrb[0].mxu0
    %v1549 = vadd.f32 %v1199, %v1548
    %v1550 = vpop.f32.mrb[0].mxu0
    %v1551 = vadd.f32 %v1203, %v1550
    %v1552 = vpop.f32.mrb[0].mxu0
    %v1553 = vadd.f32 %v1199, %v1552
    %v1554 = vpop.f32.mrb[0].mxu0
    %v1555 = vadd.f32 %v1203, %v1554
    %1556 = vdwg.mxu0
    %v1557 = vadd.f32 %v1399, %v1401
    %1558 = vadd.xlane.f32.xlu0 %v1557
    %v1559 = vpop.xlane.xlu0 %1558
    %v1560 = vadd.f32 %v1403, %v1405
    %1561 = vadd.xlane.f32.xlu0 %v1560
    %v1562 = vpop.xlane.xlu0 %1561
    %v1563 = vadd.f32 %v1409, %v1411
    %1564 = vadd.xlane.f32.xlu0 %v1563
    %v1565 = vpop.xlane.xlu0 %1564
    %v1566 = vadd.f32 %v1413, %v1415
    %1567 = vadd.xlane.f32.xlu0 %v1566
    %v1568 = vpop.xlane.xlu0 %1567
    %v1569 = vadd.f32 %v1419, %v1421
    %1570 = vadd.xlane.f32.xlu0 %v1569
    %v1571 = vpop.xlane.xlu0 %1570
    %v1572 = vadd.f32 %v1423, %v1425
    %1573 = vadd.xlane.f32.xlu0 %v1572
    %v1574 = vpop.xlane.xlu0 %1573
    %v1575 = vadd.f32 %v1429, %v1431
    %1576 = vadd.xlane.f32.xlu0 %v1575
    %v1577 = vpop.xlane.xlu0 %1576
    %v1578 = vadd.f32 %v1433, %v1435
    %1579 = vadd.xlane.f32.xlu0 %v1578
    %v1580 = vpop.xlane.xlu0 %1579
    %v1581 = vadd.f32 %v1439, %v1441
    %1582 = vadd.xlane.f32.xlu0 %v1581
    %v1583 = vpop.xlane.xlu0 %1582
    %v1584 = vadd.f32 %v1443, %v1445
    %1585 = vadd.xlane.f32.xlu0 %v1584
    %v1586 = vpop.xlane.xlu0 %1585
    %v1587 = vadd.f32 %v1449, %v1451
    %1588 = vadd.xlane.f32.xlu0 %v1587
    %v1589 = vpop.xlane.xlu0 %1588
    %v1590 = vadd.f32 %v1453, %v1455
    %1591 = vadd.xlane.f32.xlu0 %v1590
    %v1592 = vpop.xlane.xlu0 %1591
    %v1593 = vadd.f32 %v1459, %v1461
    %1594 = vadd.xlane.f32.xlu0 %v1593
    %v1595 = vpop.xlane.xlu0 %1594
    %v1596 = vadd.f32 %v1463, %v1465
    %1597 = vadd.xlane.f32.xlu0 %v1596
    %v1598 = vpop.xlane.xlu0 %1597
    %v1599 = vadd.f32 %v1469, %v1471
    %1600 = vadd.xlane.f32.xlu0 %v1599
    %v1601 = vpop.xlane.xlu0 %1600
    %v1602 = vadd.f32 %v1473, %v1475
    %1603 = vadd.xlane.f32.xlu0 %v1602
    %v1604 = vpop.xlane.xlu0 %1603
    %v1605 = vadd.f32 %v1479, %v1481
    %1606 = vadd.xlane.f32.xlu0 %v1605
    %v1607 = vpop.xlane.xlu0 %1606
    %v1608 = vadd.f32 %v1483, %v1485
    %1609 = vadd.xlane.f32.xlu0 %v1608
    %v1610 = vpop.xlane.xlu0 %1609
    %v1611 = vadd.f32 %v1489, %v1491
    %1612 = vadd.xlane.f32.xlu0 %v1611
    %v1613 = vpop.xlane.xlu0 %1612
    %v1614 = vadd.f32 %v1493, %v1495
    %1615 = vadd.xlane.f32.xlu0 %v1614
    %v1616 = vpop.xlane.xlu0 %1615
    %v1617 = vadd.f32 %v1499, %v1501
    %1618 = vadd.xlane.f32.xlu0 %v1617
    %v1619 = vpop.xlane.xlu0 %1618
    %v1620 = vadd.f32 %v1503, %v1505
    %1621 = vadd.xlane.f32.xlu0 %v1620
    %v1622 = vpop.xlane.xlu0 %1621
    %v1623 = vadd.f32 %v1509, %v1511
    %1624 = vadd.xlane.f32.xlu0 %v1623
    %v1625 = vpop.xlane.xlu0 %1624
    %v1626 = vadd.f32 %v1513, %v1515
    %1627 = vadd.xlane.f32.xlu0 %v1626
    %v1628 = vpop.xlane.xlu0 %1627
    %v1629 = vadd.f32 %v1519, %v1521
    %1630 = vadd.xlane.f32.xlu0 %v1629
    %v1631 = vpop.xlane.xlu0 %1630
    %v1632 = vadd.f32 %v1523, %v1525
    %1633 = vadd.xlane.f32.xlu0 %v1632
    %v1634 = vpop.xlane.xlu0 %1633
    %v1635 = vadd.f32 %v1529, %v1531
    %1636 = vadd.xlane.f32.xlu0 %v1635
    %v1637 = vpop.xlane.xlu0 %1636
    %v1638 = vadd.f32 %v1533, %v1535
    %1639 = vadd.xlane.f32.xlu0 %v1638
    %v1640 = vpop.xlane.xlu0 %1639
    %v1641 = vadd.f32 %v1539, %v1541
    %1642 = vadd.xlane.f32.xlu0 %v1641
    %v1643 = vpop.xlane.xlu0 %1642
    %v1644 = vadd.f32 %v1543, %v1545
    %1645 = vadd.xlane.f32.xlu0 %v1644
    %v1646 = vpop.xlane.xlu0 %1645
    %v1647 = vadd.f32 %v1549, %v1551
    %1648 = vadd.xlane.f32.xlu0 %v1647
    %v1649 = vpop.xlane.xlu0 %1648
    %v1650 = vadd.f32 %v1553, %v1555
    %1651 = vadd.xlane.f32.xlu0 %v1650
    %v1652 = vpop.xlane.xlu0 %1651
    %v1653 = vmul.f32 %v1559, 0.00390625
    %v1654 = vmul.f32 %v1562, 0.00390625
    %v1655 = vmul.f32 %v1565, 0.00390625
    %v1656 = vmul.f32 %v1568, 0.00390625
    %v1657 = vmul.f32 %v1571, 0.00390625
    %v1658 = vmul.f32 %v1574, 0.00390625
    %v1659 = vmul.f32 %v1577, 0.00390625
    %v1660 = vmul.f32 %v1580, 0.00390625
    %v1661 = vmul.f32 %v1583, 0.00390625
    %v1662 = vmul.f32 %v1586, 0.00390625
    %v1663 = vmul.f32 %v1589, 0.00390625
    %v1664 = vmul.f32 %v1592, 0.00390625
    %v1665 = vmul.f32 %v1595, 0.00390625
    %v1666 = vmul.f32 %v1598, 0.00390625
    %v1667 = vmul.f32 %v1601, 0.00390625
    %v1668 = vmul.f32 %v1604, 0.00390625
    %v1669 = vmul.f32 %v1607, 0.00390625
    %v1670 = vmul.f32 %v1610, 0.00390625
    %v1671 = vmul.f32 %v1613, 0.00390625
    %v1672 = vmul.f32 %v1616, 0.00390625
    %v1673 = vmul.f32 %v1619, 0.00390625
    %v1674 = vmul.f32 %v1622, 0.00390625
    %v1675 = vmul.f32 %v1625, 0.00390625
    %v1676 = vmul.f32 %v1628, 0.00390625
    %v1677 = vmul.f32 %v1631, 0.00390625
    %v1678 = vmul.f32 %v1634, 0.00390625
    %v1679 = vmul.f32 %v1637, 0.00390625
    %v1680 = vmul.f32 %v1640, 0.00390625
    %v1681 = vmul.f32 %v1643, 0.00390625
    %v1682 = vmul.f32 %v1646, 0.00390625
    %v1683 = vmul.f32 %v1649, 0.00390625
    %v1684 = vmul.f32 %v1652, 0.00390625
    %v1685 = vmul.f32 %v1399, %v1399
    %v1686 = vmul.f32 %v1401, %v1401
    %v1687 = vmul.f32 %v1403, %v1403
    %v1688 = vmul.f32 %v1405, %v1405
    %v1689 = vmul.f32 %v1409, %v1409
    %v1690 = vmul.f32 %v1411, %v1411
    %v1691 = vmul.f32 %v1413, %v1413
    %v1692 = vmul.f32 %v1415, %v1415
    %v1693 = vmul.f32 %v1419, %v1419
    %v1694 = vmul.f32 %v1421, %v1421
    %v1695 = vmul.f32 %v1423, %v1423
    %v1696 = vmul.f32 %v1425, %v1425
    %v1697 = vmul.f32 %v1429, %v1429
    %v1698 = vmul.f32 %v1431, %v1431
    %v1699 = vmul.f32 %v1433, %v1433
    %v1700 = vmul.f32 %v1435, %v1435
    %v1701 = vmul.f32 %v1439, %v1439
    %v1702 = vmul.f32 %v1441, %v1441
    %v1703 = vmul.f32 %v1443, %v1443
    %v1704 = vmul.f32 %v1445, %v1445
    %v1705 = vmul.f32 %v1449, %v1449
    %v1706 = vmul.f32 %v1451, %v1451
    %v1707 = vmul.f32 %v1453, %v1453
    %v1708 = vmul.f32 %v1455, %v1455
    %v1709 = vmul.f32 %v1459, %v1459
    %v1710 = vmul.f32 %v1461, %v1461
    %v1711 = vmul.f32 %v1463, %v1463
    %v1712 = vmul.f32 %v1465, %v1465
    %v1713 = vmul.f32 %v1469, %v1469
    %v1714 = vmul.f32 %v1471, %v1471
    %v1715 = vmul.f32 %v1473, %v1473
    %v1716 = vmul.f32 %v1475, %v1475
    %v1717 = vmul.f32 %v1479, %v1479
    %v1718 = vmul.f32 %v1481, %v1481
    %v1719 = vmul.f32 %v1483, %v1483
    %v1720 = vmul.f32 %v1485, %v1485
    %v1721 = vmul.f32 %v1489, %v1489
    %v1722 = vmul.f32 %v1491, %v1491
    %v1723 = vmul.f32 %v1493, %v1493
    %v1724 = vmul.f32 %v1495, %v1495
    %v1725 = vmul.f32 %v1499, %v1499
    %v1726 = vmul.f32 %v1501, %v1501
    %v1727 = vmul.f32 %v1503, %v1503
    %v1728 = vmul.f32 %v1505, %v1505
    %v1729 = vmul.f32 %v1509, %v1509
    %v1730 = vmul.f32 %v1511, %v1511
    %v1731 = vmul.f32 %v1513, %v1513
    %v1732 = vmul.f32 %v1515, %v1515
    %v1733 = vmul.f32 %v1519, %v1519
    %v1734 = vmul.f32 %v1521, %v1521
    %v1735 = vmul.f32 %v1523, %v1523
    %v1736 = vmul.f32 %v1525, %v1525
    %v1737 = vmul.f32 %v1529, %v1529
    %v1738 = vmul.f32 %v1531, %v1531
    %v1739 = vmul.f32 %v1533, %v1533
    %v1740 = vmul.f32 %v1535, %v1535
    %v1741 = vmul.f32 %v1539, %v1539
    %v1742 = vmul.f32 %v1541, %v1541
    %v1743 = vmul.f32 %v1543, %v1543
    %v1744 = vmul.f32 %v1545, %v1545
    %v1745 = vmul.f32 %v1549, %v1549
    %v1746 = vmul.f32 %v1551, %v1551
    %v1747 = vmul.f32 %v1553, %v1553
    %v1748 = vmul.f32 %v1555, %v1555
    %v1749 = vadd.f32 %v1685, %v1686
    %1750 = vadd.xlane.f32.xlu0 %v1749
    %v1751 = vpop.xlane.xlu0 %1750
    %v1752 = vadd.f32 %v1687, %v1688
    %1753 = vadd.xlane.f32.xlu0 %v1752
    %v1754 = vpop.xlane.xlu0 %1753
    %v1755 = vadd.f32 %v1689, %v1690
    %1756 = vadd.xlane.f32.xlu0 %v1755
    %v1757 = vpop.xlane.xlu0 %1756
    %v1758 = vadd.f32 %v1691, %v1692
    %1759 = vadd.xlane.f32.xlu0 %v1758
    %v1760 = vpop.xlane.xlu0 %1759
    %v1761 = vadd.f32 %v1693, %v1694
    %1762 = vadd.xlane.f32.xlu0 %v1761
    %v1763 = vpop.xlane.xlu0 %1762
    %v1764 = vadd.f32 %v1695, %v1696
    %1765 = vadd.xlane.f32.xlu0 %v1764
    %v1766 = vpop.xlane.xlu0 %1765
    %v1767 = vadd.f32 %v1697, %v1698
    %1768 = vadd.xlane.f32.xlu0 %v1767
    %v1769 = vpop.xlane.xlu0 %1768
    %v1770 = vadd.f32 %v1699, %v1700
    %1771 = vadd.xlane.f32.xlu0 %v1770
    %v1772 = vpop.xlane.xlu0 %1771
    %v1773 = vadd.f32 %v1701, %v1702
    %1774 = vadd.xlane.f32.xlu0 %v1773
    %v1775 = vpop.xlane.xlu0 %1774
    %v1776 = vadd.f32 %v1703, %v1704
    %1777 = vadd.xlane.f32.xlu0 %v1776
    %v1778 = vpop.xlane.xlu0 %1777
    %v1779 = vadd.f32 %v1705, %v1706
    %1780 = vadd.xlane.f32.xlu0 %v1779
    %v1781 = vpop.xlane.xlu0 %1780
    %v1782 = vadd.f32 %v1707, %v1708
    %1783 = vadd.xlane.f32.xlu0 %v1782
    %v1784 = vpop.xlane.xlu0 %1783
    %v1785 = vadd.f32 %v1709, %v1710
    %1786 = vadd.xlane.f32.xlu0 %v1785
    %v1787 = vpop.xlane.xlu0 %1786
    %v1788 = vadd.f32 %v1711, %v1712
    %1789 = vadd.xlane.f32.xlu0 %v1788
    %v1790 = vpop.xlane.xlu0 %1789
    %v1791 = vadd.f32 %v1713, %v1714
    %1792 = vadd.xlane.f32.xlu0 %v1791
    %v1793 = vpop.xlane.xlu0 %1792
    %v1794 = vadd.f32 %v1715, %v1716
    %1795 = vadd.xlane.f32.xlu0 %v1794
    %v1796 = vpop.xlane.xlu0 %1795
    %v1797 = vadd.f32 %v1717, %v1718
    %1798 = vadd.xlane.f32.xlu0 %v1797
    %v1799 = vpop.xlane.xlu0 %1798
    %v1800 = vadd.f32 %v1719, %v1720
    %1801 = vadd.xlane.f32.xlu0 %v1800
    %v1802 = vpop.xlane.xlu0 %1801
    %v1803 = vadd.f32 %v1721, %v1722
    %1804 = vadd.xlane.f32.xlu0 %v1803
    %v1805 = vpop.xlane.xlu0 %1804
    %v1806 = vadd.f32 %v1723, %v1724
    %1807 = vadd.xlane.f32.xlu0 %v1806
    %v1808 = vpop.xlane.xlu0 %1807
    %v1809 = vadd.f32 %v1725, %v1726
    %1810 = vadd.xlane.f32.xlu0 %v1809
    %v1811 = vpop.xlane.xlu0 %1810
    %v1812 = vadd.f32 %v1727, %v1728
    %1813 = vadd.xlane.f32.xlu0 %v1812
    %v1814 = vpop.xlane.xlu0 %1813
    %v1815 = vadd.f32 %v1729, %v1730
    %1816 = vadd.xlane.f32.xlu0 %v1815
    %v1817 = vpop.xlane.xlu0 %1816
    %v1818 = vadd.f32 %v1731, %v1732
    %1819 = vadd.xlane.f32.xlu0 %v1818
    %v1820 = vpop.xlane.xlu0 %1819
    %v1821 = vadd.f32 %v1733, %v1734
    %1822 = vadd.xlane.f32.xlu0 %v1821
    %v1823 = vpop.xlane.xlu0 %1822
    %v1824 = vadd.f32 %v1735, %v1736
    %1825 = vadd.xlane.f32.xlu0 %v1824
    %v1826 = vpop.xlane.xlu0 %1825
    %v1827 = vadd.f32 %v1737, %v1738
    %1828 = vadd.xlane.f32.xlu0 %v1827
    %v1829 = vpop.xlane.xlu0 %1828
    %v1830 = vadd.f32 %v1739, %v1740
    %1831 = vadd.xlane.f32.xlu0 %v1830
    %v1832 = vpop.xlane.xlu0 %1831
    %v1833 = vadd.f32 %v1741, %v1742
    %1834 = vadd.xlane.f32.xlu0 %v1833
    %v1835 = vpop.xlane.xlu0 %1834
    %v1836 = vadd.f32 %v1743, %v1744
    %1837 = vadd.xlane.f32.xlu0 %v1836
    %v1838 = vpop.xlane.xlu0 %1837
    %v1839 = vadd.f32 %v1745, %v1746
    %1840 = vadd.xlane.f32.xlu0 %v1839
    %v1841 = vpop.xlane.xlu0 %1840
    %v1842 = vadd.f32 %v1747, %v1748
    %1843 = vadd.xlane.f32.xlu0 %v1842
    %v1844 = vpop.xlane.xlu0 %1843
    %v1845 = vmul.f32 %v1751, 0.00390625
    %v1846 = vmul.f32 %v1754, 0.00390625
    %v1847 = vmul.f32 %v1757, 0.00390625
    %v1848 = vmul.f32 %v1760, 0.00390625
    %v1849 = vmul.f32 %v1763, 0.00390625
    %v1850 = vmul.f32 %v1766, 0.00390625
    %v1851 = vmul.f32 %v1769, 0.00390625
    %v1852 = vmul.f32 %v1772, 0.00390625
    %v1853 = vmul.f32 %v1775, 0.00390625
    %v1854 = vmul.f32 %v1778, 0.00390625
    %v1855 = vmul.f32 %v1781, 0.00390625
    %v1856 = vmul.f32 %v1784, 0.00390625
    %v1857 = vmul.f32 %v1787, 0.00390625
    %v1858 = vmul.f32 %v1790, 0.00390625
    %v1859 = vmul.f32 %v1793, 0.00390625
    %v1860 = vmul.f32 %v1796, 0.00390625
    %v1861 = vmul.f32 %v1799, 0.00390625
    %v1862 = vmul.f32 %v1802, 0.00390625
    %v1863 = vmul.f32 %v1805, 0.00390625
    %v1864 = vmul.f32 %v1808, 0.00390625
    %v1865 = vmul.f32 %v1811, 0.00390625
    %v1866 = vmul.f32 %v1814, 0.00390625
    %v1867 = vmul.f32 %v1817, 0.00390625
    %v1868 = vmul.f32 %v1820, 0.00390625
    %v1869 = vmul.f32 %v1823, 0.00390625
    %v1870 = vmul.f32 %v1826, 0.00390625
    %v1871 = vmul.f32 %v1829, 0.00390625
    %v1872 = vmul.f32 %v1832, 0.00390625
    %v1873 = vmul.f32 %v1835, 0.00390625
    %v1874 = vmul.f32 %v1838, 0.00390625
    %v1875 = vmul.f32 %v1841, 0.00390625
    %v1876 = vmul.f32 %v1844, 0.00390625
    %v1877 = vmul.f32 %v1653, %v1653
    %v1878 = vmul.f32 %v1654, %v1654
    %v1879 = vmul.f32 %v1655, %v1655
    %v1880 = vmul.f32 %v1656, %v1656
    %v1881 = vmul.f32 %v1657, %v1657
    %v1882 = vmul.f32 %v1658, %v1658
    %v1883 = vmul.f32 %v1659, %v1659
    %v1884 = vmul.f32 %v1660, %v1660
    %v1885 = vmul.f32 %v1661, %v1661
    %v1886 = vmul.f32 %v1662, %v1662
    %v1887 = vmul.f32 %v1663, %v1663
    %v1888 = vmul.f32 %v1664, %v1664
    %v1889 = vmul.f32 %v1665, %v1665
    %v1890 = vmul.f32 %v1666, %v1666
    %v1891 = vmul.f32 %v1667, %v1667
    %v1892 = vmul.f32 %v1668, %v1668
    %v1893 = vmul.f32 %v1669, %v1669
    %v1894 = vmul.f32 %v1670, %v1670
    %v1895 = vmul.f32 %v1671, %v1671
    %v1896 = vmul.f32 %v1672, %v1672
    %v1897 = vmul.f32 %v1673, %v1673
    %v1898 = vmul.f32 %v1674, %v1674
    %v1899 = vmul.f32 %v1675, %v1675
    %v1900 = vmul.f32 %v1676, %v1676
    %v1901 = vmul.f32 %v1677, %v1677
    %v1902 = vmul.f32 %v1678, %v1678
    %v1903 = vmul.f32 %v1679, %v1679
    %v1904 = vmul.f32 %v1680, %v1680
    %v1905 = vmul.f32 %v1681, %v1681
    %v1906 = vmul.f32 %v1682, %v1682
    %v1907 = vmul.f32 %v1683, %v1683
    %v1908 = vmul.f32 %v1684, %v1684
    %v1909 = vsub.f32 %v1845, %v1877
    %v1910 = vsub.f32 %v1846, %v1878
    %v1911 = vsub.f32 %v1847, %v1879
    %v1912 = vsub.f32 %v1848, %v1880
    %v1913 = vsub.f32 %v1849, %v1881
    %v1914 = vsub.f32 %v1850, %v1882
    %v1915 = vsub.f32 %v1851, %v1883
    %v1916 = vsub.f32 %v1852, %v1884
    %v1917 = vsub.f32 %v1853, %v1885
    %v1918 = vsub.f32 %v1854, %v1886
    %v1919 = vsub.f32 %v1855, %v1887
    %v1920 = vsub.f32 %v1856, %v1888
    %v1921 = vsub.f32 %v1857, %v1889
    %v1922 = vsub.f32 %v1858, %v1890
    %v1923 = vsub.f32 %v1859, %v1891
    %v1924 = vsub.f32 %v1860, %v1892
    %v1925 = vsub.f32 %v1861, %v1893
    %v1926 = vsub.f32 %v1862, %v1894
    %v1927 = vsub.f32 %v1863, %v1895
    %v1928 = vsub.f32 %v1864, %v1896
    %v1929 = vsub.f32 %v1865, %v1897
    %v1930 = vsub.f32 %v1866, %v1898
    %v1931 = vsub.f32 %v1867, %v1899
    %v1932 = vsub.f32 %v1868, %v1900
    %v1933 = vsub.f32 %v1869, %v1901
    %v1934 = vsub.f32 %v1870, %v1902
    %v1935 = vsub.f32 %v1871, %v1903
    %v1936 = vsub.f32 %v1872, %v1904
    %v1937 = vsub.f32 %v1873, %v1905
    %v1938 = vsub.f32 %v1874, %v1906
    %v1939 = vsub.f32 %v1875, %v1907
    %v1940 = vsub.f32 %v1876, %v1908
    %v1941 = vadd.f32 %v1909, 1e-05
    %v1942 = vadd.f32 %v1910, 1e-05
    %v1943 = vadd.f32 %v1911, 1e-05
    %v1944 = vadd.f32 %v1912, 1e-05
    %v1945 = vadd.f32 %v1913, 1e-05
    %v1946 = vadd.f32 %v1914, 1e-05
    %v1947 = vadd.f32 %v1915, 1e-05
    %v1948 = vadd.f32 %v1916, 1e-05
    %v1949 = vadd.f32 %v1917, 1e-05
    %v1950 = vadd.f32 %v1918, 1e-05
    %v1951 = vadd.f32 %v1919, 1e-05
    %v1952 = vadd.f32 %v1920, 1e-05
    %v1953 = vadd.f32 %v1921, 1e-05
    %v1954 = vadd.f32 %v1922, 1e-05
    %v1955 = vadd.f32 %v1923, 1e-05
    %v1956 = vadd.f32 %v1924, 1e-05
    %v1957 = vadd.f32 %v1925, 1e-05
    %v1958 = vadd.f32 %v1926, 1e-05
    %v1959 = vadd.f32 %v1927, 1e-05
    %v1960 = vadd.f32 %v1928, 1e-05
    %v1961 = vadd.f32 %v1929, 1e-05
    %v1962 = vadd.f32 %v1930, 1e-05
    %v1963 = vadd.f32 %v1931, 1e-05
    %v1964 = vadd.f32 %v1932, 1e-05
    %v1965 = vadd.f32 %v1933, 1e-05
    %v1966 = vadd.f32 %v1934, 1e-05
    %v1967 = vadd.f32 %v1935, 1e-05
    %v1968 = vadd.f32 %v1936, 1e-05
    %v1969 = vadd.f32 %v1937, 1e-05
    %v1970 = vadd.f32 %v1938, 1e-05
    %v1971 = vadd.f32 %v1939, 1e-05
    %v1972 = vadd.f32 %v1940, 1e-05
    %v1973 = vrsqrt.pop %v1941
    %v1974 = vrsqrt.pop %v1942
    %v1975 = vrsqrt.pop %v1943
    %v1976 = vrsqrt.pop %v1944
    %v1977 = vrsqrt.pop %v1945
    %v1978 = vrsqrt.pop %v1946
    %v1979 = vrsqrt.pop %v1947
    %v1980 = vrsqrt.pop %v1948
    %v1981 = vrsqrt.pop %v1949
    %v1982 = vrsqrt.pop %v1950
    %v1983 = vrsqrt.pop %v1951
    %v1984 = vrsqrt.pop %v1952
    %v1985 = vrsqrt.pop %v1953
    %v1986 = vrsqrt.pop %v1954
    %v1987 = vrsqrt.pop %v1955
    %v1988 = vrsqrt.pop %v1956
    %v1989 = vrsqrt.pop %v1957
    %v1990 = vrsqrt.pop %v1958
    %v1991 = vrsqrt.pop %v1959
    %v1992 = vrsqrt.pop %v1960
    %v1993 = vrsqrt.pop %v1961
    %v1994 = vrsqrt.pop %v1962
    %v1995 = vrsqrt.pop %v1963
    %v1996 = vrsqrt.pop %v1964
    %v1997 = vrsqrt.pop %v1965
    %v1998 = vrsqrt.pop %v1966
    %v1999 = vrsqrt.pop %v1967
    %v2000 = vrsqrt.pop %v1968
    %v2001 = vrsqrt.pop %v1969
    %v2002 = vrsqrt.pop %v1970
    %v2003 = vrsqrt.pop %v1971
    %v2004 = vrsqrt.pop %v1972
    %v2005 = vsub.f32 %v1399, %v1653
    %v2006 = vsub.f32 %v1401, %v1653
    %v2007 = vsub.f32 %v1403, %v1654
    %v2008 = vsub.f32 %v1405, %v1654
    %v2009 = vsub.f32 %v1409, %v1655
    %v2010 = vsub.f32 %v1411, %v1655
    %v2011 = vsub.f32 %v1413, %v1656
    %v2012 = vsub.f32 %v1415, %v1656
    %v2013 = vsub.f32 %v1419, %v1657
    %v2014 = vsub.f32 %v1421, %v1657
    %v2015 = vsub.f32 %v1423, %v1658
    %v2016 = vsub.f32 %v1425, %v1658
    %v2017 = vsub.f32 %v1429, %v1659
    %v2018 = vsub.f32 %v1431, %v1659
    %v2019 = vsub.f32 %v1433, %v1660
    %v2020 = vsub.f32 %v1435, %v1660
    %v2021 = vsub.f32 %v1439, %v1661
    %v2022 = vsub.f32 %v1441, %v1661
    %v2023 = vsub.f32 %v1443, %v1662
    %v2024 = vsub.f32 %v1445, %v1662
    %v2025 = vsub.f32 %v1449, %v1663
    %v2026 = vsub.f32 %v1451, %v1663
    %v2027 = vsub.f32 %v1453, %v1664
    %v2028 = vsub.f32 %v1455, %v1664
    %v2029 = vsub.f32 %v1459, %v1665
    %v2030 = vsub.f32 %v1461, %v1665
    %v2031 = vsub.f32 %v1463, %v1666
    %v2032 = vsub.f32 %v1465, %v1666
    %v2033 = vsub.f32 %v1469, %v1667
    %v2034 = vsub.f32 %v1471, %v1667
    %v2035 = vsub.f32 %v1473, %v1668
    %v2036 = vsub.f32 %v1475, %v1668
    %v2037 = vsub.f32 %v1479, %v1669
    %v2038 = vsub.f32 %v1481, %v1669
    %v2039 = vsub.f32 %v1483, %v1670
    %v2040 = vsub.f32 %v1485, %v1670
    %v2041 = vsub.f32 %v1489, %v1671
    %v2042 = vsub.f32 %v1491, %v1671
    %v2043 = vsub.f32 %v1493, %v1672
    %v2044 = vsub.f32 %v1495, %v1672
    %v2045 = vsub.f32 %v1499, %v1673
    %v2046 = vsub.f32 %v1501, %v1673
    %v2047 = vsub.f32 %v1503, %v1674
    %v2048 = vsub.f32 %v1505, %v1674
    %v2049 = vsub.f32 %v1509, %v1675
    %v2050 = vsub.f32 %v1511, %v1675
    %v2051 = vsub.f32 %v1513, %v1676
    %v2052 = vsub.f32 %v1515, %v1676
    %v2053 = vsub.f32 %v1519, %v1677
    %v2054 = vsub.f32 %v1521, %v1677
    %v2055 = vsub.f32 %v1523, %v1678
    %v2056 = vsub.f32 %v1525, %v1678
    %v2057 = vsub.f32 %v1529, %v1679
    %v2058 = vsub.f32 %v1531, %v1679
    %v2059 = vsub.f32 %v1533, %v1680
    %v2060 = vsub.f32 %v1535, %v1680
    %v2061 = vsub.f32 %v1539, %v1681
    %v2062 = vsub.f32 %v1541, %v1681
    %v2063 = vsub.f32 %v1543, %v1682
    %v2064 = vsub.f32 %v1545, %v1682
    %v2065 = vsub.f32 %v1549, %v1683
    %v2066 = vsub.f32 %v1551, %v1683
    %v2067 = vsub.f32 %v1553, %v1684
    %v2068 = vsub.f32 %v1555, %v1684
    %v2069 = vmul.f32 %v2005, %v1973
    %v2070 = vmul.f32 %v2006, %v1973
    %v2071 = vmul.f32 %v2007, %v1974
    %v2072 = vmul.f32 %v2008, %v1974
    %v2073 = vmul.f32 %v2009, %v1975
    %v2074 = vmul.f32 %v2010, %v1975
    %v2075 = vmul.f32 %v2011, %v1976
    %v2076 = vmul.f32 %v2012, %v1976
    %v2077 = vmul.f32 %v2013, %v1977
    %v2078 = vmul.f32 %v2014, %v1977
    %v2079 = vmul.f32 %v2015, %v1978
    %v2080 = vmul.f32 %v2016, %v1978
    %v2081 = vmul.f32 %v2017, %v1979
    %v2082 = vmul.f32 %v2018, %v1979
    %v2083 = vmul.f32 %v2019, %v1980
    %v2084 = vmul.f32 %v2020, %v1980
    %v2085 = vmul.f32 %v2021, %v1981
    %v2086 = vmul.f32 %v2022, %v1981
    %v2087 = vmul.f32 %v2023, %v1982
    %v2088 = vmul.f32 %v2024, %v1982
    %v2089 = vmul.f32 %v2025, %v1983
    %v2090 = vmul.f32 %v2026, %v1983
    %v2091 = vmul.f32 %v2027, %v1984
    %v2092 = vmul.f32 %v2028, %v1984
    %v2093 = vmul.f32 %v2029, %v1985
    %v2094 = vmul.f32 %v2030, %v1985
    %v2095 = vmul.f32 %v2031, %v1986
    %v2096 = vmul.f32 %v2032, %v1986
    %v2097 = vmul.f32 %v2033, %v1987
    %v2098 = vmul.f32 %v2034, %v1987
    %v2099 = vmul.f32 %v2035, %v1988
    %v2100 = vmul.f32 %v2036, %v1988
    %v2101 = vmul.f32 %v2037, %v1989
    %v2102 = vmul.f32 %v2038, %v1989
    %v2103 = vmul.f32 %v2039, %v1990
    %v2104 = vmul.f32 %v2040, %v1990
    %v2105 = vmul.f32 %v2041, %v1991
    %v2106 = vmul.f32 %v2042, %v1991
    %v2107 = vmul.f32 %v2043, %v1992
    %v2108 = vmul.f32 %v2044, %v1992
    %v2109 = vmul.f32 %v2045, %v1993
    %v2110 = vmul.f32 %v2046, %v1993
    %v2111 = vmul.f32 %v2047, %v1994
    %v2112 = vmul.f32 %v2048, %v1994
    %v2113 = vmul.f32 %v2049, %v1995
    %v2114 = vmul.f32 %v2050, %v1995
    %v2115 = vmul.f32 %v2051, %v1996
    %v2116 = vmul.f32 %v2052, %v1996
    %v2117 = vmul.f32 %v2053, %v1997
    %v2118 = vmul.f32 %v2054, %v1997
    %v2119 = vmul.f32 %v2055, %v1998
    %v2120 = vmul.f32 %v2056, %v1998
    %v2121 = vmul.f32 %v2057, %v1999
    %v2122 = vmul.f32 %v2058, %v1999
    %v2123 = vmul.f32 %v2059, %v2000
    %v2124 = vmul.f32 %v2060, %v2000
    %v2125 = vmul.f32 %v2061, %v2001
    %v2126 = vmul.f32 %v2062, %v2001
    %v2127 = vmul.f32 %v2063, %v2002
    %v2128 = vmul.f32 %v2064, %v2002
    %v2129 = vmul.f32 %v2065, %v2003
    %v2130 = vmul.f32 %v2066, %v2003
    %v2131 = vmul.f32 %v2067, %v2004
    %v2132 = vmul.f32 %v2068, %v2004
    %v2133 = vlaneseq
    %v2134 = vshrl.u32 %v2133, 7
    %v2135 = vsub.s32 4, %v2134
    %v2136 = vrot.slane %v36, %v2135
    %v2137 = vlaneseq
    %v2138 = vshrl.u32 %v2137, 7
    %v2139 = vsub.s32 4, %v2138
    %v2140 = vrot.slane %v37, %v2139
    %v2141 = vmul.f32 %v2069, %v2136
    %v2142 = vmul.f32 %v2070, %v2140
    %v2143 = vmul.f32 %v2071, %v2136
    %v2144 = vmul.f32 %v2072, %v2140
    %v2145 = vmul.f32 %v2073, %v2136
    %v2146 = vmul.f32 %v2074, %v2140
    %v2147 = vmul.f32 %v2075, %v2136
    %v2148 = vmul.f32 %v2076, %v2140
    %v2149 = vmul.f32 %v2077, %v2136
    %v2150 = vmul.f32 %v2078, %v2140
    %v2151 = vmul.f32 %v2079, %v2136
    %v2152 = vmul.f32 %v2080, %v2140
    %v2153 = vmul.f32 %v2081, %v2136
    %v2154 = vmul.f32 %v2082, %v2140
    %v2155 = vmul.f32 %v2083, %v2136
    %v2156 = vmul.f32 %v2084, %v2140
    %v2157 = vmul.f32 %v2085, %v2136
    %v2158 = vmul.f32 %v2086, %v2140
    %v2159 = vmul.f32 %v2087, %v2136
    %v2160 = vmul.f32 %v2088, %v2140
    %v2161 = vmul.f32 %v2089, %v2136
    %v2162 = vmul.f32 %v2090, %v2140
    %v2163 = vmul.f32 %v2091, %v2136
    %v2164 = vmul.f32 %v2092, %v2140
    %v2165 = vmul.f32 %v2093, %v2136
    %v2166 = vmul.f32 %v2094, %v2140
    %v2167 = vmul.f32 %v2095, %v2136
    %v2168 = vmul.f32 %v2096, %v2140
    %v2169 = vmul.f32 %v2097, %v2136
    %v2170 = vmul.f32 %v2098, %v2140
    %v2171 = vmul.f32 %v2099, %v2136
    %v2172 = vmul.f32 %v2100, %v2140
    %v2173 = vmul.f32 %v2101, %v2136
    %v2174 = vmul.f32 %v2102, %v2140
    %v2175 = vmul.f32 %v2103, %v2136
    %v2176 = vmul.f32 %v2104, %v2140
    %v2177 = vmul.f32 %v2105, %v2136
    %v2178 = vmul.f32 %v2106, %v2140
    %v2179 = vmul.f32 %v2107, %v2136
    %v2180 = vmul.f32 %v2108, %v2140
    %v2181 = vmul.f32 %v2109, %v2136
    %v2182 = vmul.f32 %v2110, %v2140
    %v2183 = vmul.f32 %v2111, %v2136
    %v2184 = vmul.f32 %v2112, %v2140
    %v2185 = vmul.f32 %v2113, %v2136
    %v2186 = vmul.f32 %v2114, %v2140
    %v2187 = vmul.f32 %v2115, %v2136
    %v2188 = vmul.f32 %v2116, %v2140
    %v2189 = vmul.f32 %v2117, %v2136
    %v2190 = vmul.f32 %v2118, %v2140
    %v2191 = vmul.f32 %v2119, %v2136
    %v2192 = vmul.f32 %v2120, %v2140
    %v2193 = vmul.f32 %v2121, %v2136
    %v2194 = vmul.f32 %v2122, %v2140
    %v2195 = vmul.f32 %v2123, %v2136
    %v2196 = vmul.f32 %v2124, %v2140
    %v2197 = vmul.f32 %v2125, %v2136
    %v2198 = vmul.f32 %v2126, %v2140
    %v2199 = vmul.f32 %v2127, %v2136
    %v2200 = vmul.f32 %v2128, %v2140
    %v2201 = vmul.f32 %v2129, %v2136
    %v2202 = vmul.f32 %v2130, %v2140
    %v2203 = vmul.f32 %v2131, %v2136
    %v2204 = vmul.f32 %v2132, %v2140
    %v2205 = vlaneseq
    %v2206 = vshrl.u32 %v2205, 7
    %v2207 = vsub.s32 5, %v2206
    %v2208 = vrot.slane %v36, %v2207
    %v2209 = vlaneseq
    %v2210 = vshrl.u32 %v2209, 7
    %v2211 = vsub.s32 5, %v2210
    %v2212 = vrot.slane %v37, %v2211
    %v2213 = vadd.f32 %v2141, %v2208
    %v2214 = vadd.f32 %v2142, %v2212
    %v2215 = vadd.f32 %v2143, %v2208
    %v2216 = vadd.f32 %v2144, %v2212
    %v2217 = vadd.f32 %v2145, %v2208
    %v2218 = vadd.f32 %v2146, %v2212
    %v2219 = vadd.f32 %v2147, %v2208
    %v2220 = vadd.f32 %v2148, %v2212
    %v2221 = vadd.f32 %v2149, %v2208
    %v2222 = vadd.f32 %v2150, %v2212
    %v2223 = vadd.f32 %v2151, %v2208
    %v2224 = vadd.f32 %v2152, %v2212
    %v2225 = vadd.f32 %v2153, %v2208
    %v2226 = vadd.f32 %v2154, %v2212
    %v2227 = vadd.f32 %v2155, %v2208
    %v2228 = vadd.f32 %v2156, %v2212
    %v2229 = vadd.f32 %v2157, %v2208
    %v2230 = vadd.f32 %v2158, %v2212
    %v2231 = vadd.f32 %v2159, %v2208
    %v2232 = vadd.f32 %v2160, %v2212
    %v2233 = vadd.f32 %v2161, %v2208
    %v2234 = vadd.f32 %v2162, %v2212
    %v2235 = vadd.f32 %v2163, %v2208
    %v2236 = vadd.f32 %v2164, %v2212
    %v2237 = vadd.f32 %v2165, %v2208
    %v2238 = vadd.f32 %v2166, %v2212
    %v2239 = vadd.f32 %v2167, %v2208
    %v2240 = vadd.f32 %v2168, %v2212
    %v2241 = vadd.f32 %v2169, %v2208
    %v2242 = vadd.f32 %v2170, %v2212
    %v2243 = vadd.f32 %v2171, %v2208
    %v2244 = vadd.f32 %v2172, %v2212
    %v2245 = vadd.f32 %v2173, %v2208
    %v2246 = vadd.f32 %v2174, %v2212
    %v2247 = vadd.f32 %v2175, %v2208
    %v2248 = vadd.f32 %v2176, %v2212
    %v2249 = vadd.f32 %v2177, %v2208
    %v2250 = vadd.f32 %v2178, %v2212
    %v2251 = vadd.f32 %v2179, %v2208
    %v2252 = vadd.f32 %v2180, %v2212
    %v2253 = vadd.f32 %v2181, %v2208
    %v2254 = vadd.f32 %v2182, %v2212
    %v2255 = vadd.f32 %v2183, %v2208
    %v2256 = vadd.f32 %v2184, %v2212
    %v2257 = vadd.f32 %v2185, %v2208
    %v2258 = vadd.f32 %v2186, %v2212
    %v2259 = vadd.f32 %v2187, %v2208
    %v2260 = vadd.f32 %v2188, %v2212
    %v2261 = vadd.f32 %v2189, %v2208
    %v2262 = vadd.f32 %v2190, %v2212
    %v2263 = vadd.f32 %v2191, %v2208
    %v2264 = vadd.f32 %v2192, %v2212
    %v2265 = vadd.f32 %v2193, %v2208
    %v2266 = vadd.f32 %v2194, %v2212
    %v2267 = vadd.f32 %v2195, %v2208
    %v2268 = vadd.f32 %v2196, %v2212
    %v2269 = vadd.f32 %v2197, %v2208
    %v2270 = vadd.f32 %v2198, %v2212
    %v2271 = vadd.f32 %v2199, %v2208
    %v2272 = vadd.f32 %v2200, %v2212
    %v2273 = vadd.f32 %v2201, %v2208
    %v2274 = vadd.f32 %v2202, %v2212
    %v2275 = vadd.f32 %v2203, %v2208
    %v2276 = vadd.f32 %v2204, %v2212
    %v2277 = vmax.f32 %v2213, 0.0
    %v2278 = vmax.f32 %v2214, 0.0
    %v2279 = vmax.f32 %v2215, 0.0
    %v2280 = vmax.f32 %v2216, 0.0
    %v2281 = vmax.f32 %v2217, 0.0
    %v2282 = vmax.f32 %v2218, 0.0
    %v2283 = vmax.f32 %v2219, 0.0
    %v2284 = vmax.f32 %v2220, 0.0
    %v2285 = vmax.f32 %v2221, 0.0
    %v2286 = vmax.f32 %v2222, 0.0
    %v2287 = vmax.f32 %v2223, 0.0
    %v2288 = vmax.f32 %v2224, 0.0
    %v2289 = vmax.f32 %v2225, 0.0
    %v2290 = vmax.f32 %v2226, 0.0
    %v2291 = vmax.f32 %v2227, 0.0
    %v2292 = vmax.f32 %v2228, 0.0
    %v2293 = vmax.f32 %v2229, 0.0
    %v2294 = vmax.f32 %v2230, 0.0
    %v2295 = vmax.f32 %v2231, 0.0
    %v2296 = vmax.f32 %v2232, 0.0
    %v2297 = vmax.f32 %v2233, 0.0
    %v2298 = vmax.f32 %v2234, 0.0
    %v2299 = vmax.f32 %v2235, 0.0
    %v2300 = vmax.f32 %v2236, 0.0
    %v2301 = vmax.f32 %v2237, 0.0
    %v2302 = vmax.f32 %v2238, 0.0
    %v2303 = vmax.f32 %v2239, 0.0
    %v2304 = vmax.f32 %v2240, 0.0
    %v2305 = vmax.f32 %v2241, 0.0
    %v2306 = vmax.f32 %v2242, 0.0
    %v2307 = vmax.f32 %v2243, 0.0
    %v2308 = vmax.f32 %v2244, 0.0
    %v2309 = vmax.f32 %v2245, 0.0
    %v2310 = vmax.f32 %v2246, 0.0
    %v2311 = vmax.f32 %v2247, 0.0
    %v2312 = vmax.f32 %v2248, 0.0
    %v2313 = vmax.f32 %v2249, 0.0
    %v2314 = vmax.f32 %v2250, 0.0
    %v2315 = vmax.f32 %v2251, 0.0
    %v2316 = vmax.f32 %v2252, 0.0
    %v2317 = vmax.f32 %v2253, 0.0
    %v2318 = vmax.f32 %v2254, 0.0
    %v2319 = vmax.f32 %v2255, 0.0
    %v2320 = vmax.f32 %v2256, 0.0
    %v2321 = vmax.f32 %v2257, 0.0
    %v2322 = vmax.f32 %v2258, 0.0
    %v2323 = vmax.f32 %v2259, 0.0
    %v2324 = vmax.f32 %v2260, 0.0
    %v2325 = vmax.f32 %v2261, 0.0
    %v2326 = vmax.f32 %v2262, 0.0
    %v2327 = vmax.f32 %v2263, 0.0
    %v2328 = vmax.f32 %v2264, 0.0
    %v2329 = vmax.f32 %v2265, 0.0
    %v2330 = vmax.f32 %v2266, 0.0
    %v2331 = vmax.f32 %v2267, 0.0
    %v2332 = vmax.f32 %v2268, 0.0
    %v2333 = vmax.f32 %v2269, 0.0
    %v2334 = vmax.f32 %v2270, 0.0
    %v2335 = vmax.f32 %v2271, 0.0
    %v2336 = vmax.f32 %v2272, 0.0
    %v2337 = vmax.f32 %v2273, 0.0
    %v2338 = vmax.f32 %v2274, 0.0
    %v2339 = vmax.f32 %v2275, 0.0
    %v2340 = vmax.f32 %v2276, 0.0
    %v2341 = vpack.c.bf16 %v2279, %v2277
    %v2342 = vpack.c.bf16 %v2280, %v2278
    %v2343 = vpack.c.bf16 %v2283, %v2281
    %v2344 = vpack.c.bf16 %v2284, %v2282
    %v2345 = vpack.c.bf16 %v2287, %v2285
    %v2346 = vpack.c.bf16 %v2288, %v2286
    %v2347 = vpack.c.bf16 %v2291, %v2289
    %v2348 = vpack.c.bf16 %v2292, %v2290
    %v2349 = vpack.c.bf16 %v2295, %v2293
    %v2350 = vpack.c.bf16 %v2296, %v2294
    %v2351 = vpack.c.bf16 %v2299, %v2297
    %v2352 = vpack.c.bf16 %v2300, %v2298
    %v2353 = vpack.c.bf16 %v2303, %v2301
    %v2354 = vpack.c.bf16 %v2304, %v2302
    %v2355 = vpack.c.bf16 %v2307, %v2305
    %v2356 = vpack.c.bf16 %v2308, %v2306
    %v2357 = vpack.c.bf16 %v2311, %v2309
    %v2358 = vpack.c.bf16 %v2312, %v2310
    %v2359 = vpack.c.bf16 %v2315, %v2313
    %v2360 = vpack.c.bf16 %v2316, %v2314
    %v2361 = vpack.c.bf16 %v2319, %v2317
    %v2362 = vpack.c.bf16 %v2320, %v2318
    %v2363 = vpack.c.bf16 %v2323, %v2321
    %v2364 = vpack.c.bf16 %v2324, %v2322
    %v2365 = vpack.c.bf16 %v2327, %v2325
    %v2366 = vpack.c.bf16 %v2328, %v2326
    %v2367 = vpack.c.bf16 %v2331, %v2329
    %v2368 = vpack.c.bf16 %v2332, %v2330
    %v2369 = vpack.c.bf16 %v2335, %v2333
    %v2370 = vpack.c.bf16 %v2336, %v2334
    %v2371 = vpack.c.bf16 %v2339, %v2337
    %v2372 = vpack.c.bf16 %v2340, %v2338
    %v2373 = vld [vmem:[#allocation2] sm:$0xf]
    %v2374 = vld [vmem:[#allocation2 + $0x4] sm:$0xf]
    %v2375 = vld [vmem:[#allocation2 + $0x8] sm:$0xf]
    %v2376 = vld [vmem:[#allocation2 + $0xc] sm:$0xf]
    %v2377 = vld [vmem:[#allocation2 + $0x10] sm:$0xf]
    %v2378 = vld [vmem:[#allocation2 + $0x14] sm:$0xf]
    %v2379 = vld [vmem:[#allocation2 + $0x18] sm:$0xf]
    %v2380 = vld [vmem:[#allocation2 + $0x1c] sm:$0xf]
    %v2381 = vld [vmem:[#allocation2 + $0x20] sm:$0xf]
    %v2382 = vld [vmem:[#allocation2 + $0x24] sm:$0xf]
    %v2383 = vld [vmem:[#allocation2 + $0x28] sm:$0xf]
    %v2384 = vld [vmem:[#allocation2 + $0x2c] sm:$0xf]
    %v2385 = vld [vmem:[#allocation2 + $0x30] sm:$0xf]
    %v2386 = vld [vmem:[#allocation2 + $0x34] sm:$0xf]
    %v2387 = vld [vmem:[#allocation2 + $0x38] sm:$0xf]
    %v2388 = vld [vmem:[#allocation2 + $0x3c] sm:$0xf]
    %v2389 = vld [vmem:[#allocation2 + $0x40] sm:$0xf]
    %v2390 = vld [vmem:[#allocation2 + $0x44] sm:$0xf]
    %v2391 = vld [vmem:[#allocation2 + $0x48] sm:$0xf]
    %v2392 = vld [vmem:[#allocation2 + $0x4c] sm:$0xf]
    %v2393 = vld [vmem:[#allocation2 + $0x50] sm:$0xf]
    %v2394 = vld [vmem:[#allocation2 + $0x54] sm:$0xf]
    %v2395 = vld [vmem:[#allocation2 + $0x58] sm:$0xf]
    %v2396 = vld [vmem:[#allocation2 + $0x5c] sm:$0xf]
    %v2397 = vld [vmem:[#allocation2 + $0x60] sm:$0xf]
    %v2398 = vld [vmem:[#allocation2 + $0x64] sm:$0xf]
    %v2399 = vld [vmem:[#allocation2 + $0x68] sm:$0xf]
    %v2400 = vld [vmem:[#allocation2 + $0x6c] sm:$0xf]
    %v2401 = vld [vmem:[#allocation2 + $0x70] sm:$0xf]
    %v2402 = vld [vmem:[#allocation2 + $0x74] sm:$0xf]
    %v2403 = vld [vmem:[#allocation2 + $0x78] sm:$0xf]
    %v2404 = vld [vmem:[#allocation2 + $0x7c] sm:$0xf]
    %v2405 = vlaneseq
    %v2406 = vshrl.u32 %v2405, 7
    %v2407 = vsub.s32 6, %v2406
    %v2408 = vrot.slane %v36, %v2407
    %v2441 = vunpack.c.l.b16 %v2373
    %v2442 = vunpack.c.l.b16 %v2374
    %v2443 = vunpack.c.l.b16 %v2375
    %v2444 = vunpack.c.l.b16 %v2376
    %v2445 = vunpack.c.l.b16 %v2377
    %v2446 = vunpack.c.l.b16 %v2378
    %v2447 = vunpack.c.l.b16 %v2379
    %v2448 = vunpack.c.l.b16 %v2380
    %v2449 = vunpack.c.l.b16 %v2381
    %v2450 = vunpack.c.l.b16 %v2382
    %v2451 = vunpack.c.l.b16 %v2383
    %v2452 = vunpack.c.l.b16 %v2384
    %v2453 = vunpack.c.l.b16 %v2385
    %v2454 = vunpack.c.l.b16 %v2386
    %v2455 = vunpack.c.l.b16 %v2387
    %v2456 = vunpack.c.l.b16 %v2388
    %v2457 = vunpack.c.l.b16 %v2389
    %v2458 = vunpack.c.l.b16 %v2390
    %v2459 = vunpack.c.l.b16 %v2391
    %v2460 = vunpack.c.l.b16 %v2392
    %v2461 = vunpack.c.l.b16 %v2393
    %v2462 = vunpack.c.l.b16 %v2394
    %v2463 = vunpack.c.l.b16 %v2395
    %v2464 = vunpack.c.l.b16 %v2396
    %v2465 = vunpack.c.l.b16 %v2397
    %v2466 = vunpack.c.l.b16 %v2398
    %v2467 = vunpack.c.l.b16 %v2399
    %v2468 = vunpack.c.l.b16 %v2400
    %v2469 = vunpack.c.l.b16 %v2401
    %v2470 = vunpack.c.l.b16 %v2402
    %v2471 = vunpack.c.l.b16 %v2403
    %v2472 = vunpack.c.l.b16 %v2404
    %v2473 = vpack.c.b16 %v2442, %v2441
    %v2474 = vpack.c.b16 %v2444, %v2443
    %v2475 = vpack.c.b16 %v2446, %v2445
    %v2476 = vpack.c.b16 %v2448, %v2447
    %v2477 = vpack.c.b16 %v2450, %v2449
    %v2478 = vpack.c.b16 %v2452, %v2451
    %v2479 = vpack.c.b16 %v2454, %v2453
    %v2480 = vpack.c.b16 %v2456, %v2455
    %v2481 = vpack.c.b16 %v2458, %v2457
    %v2482 = vpack.c.b16 %v2460, %v2459
    %v2483 = vpack.c.b16 %v2462, %v2461
    %v2484 = vpack.c.b16 %v2464, %v2463
    %v2485 = vpack.c.b16 %v2466, %v2465
    %v2486 = vpack.c.b16 %v2468, %v2467
    %v2487 = vpack.c.b16 %v2470, %v2469
    %v2488 = vpack.c.b16 %v2472, %v2471
    %2505 = vmatprep.subr.bf16.mxu0 0
    %2506 = vmatpush1.bf16.msra.mxu0 %v2473
    %2507 = vmatprep.subr.bf16.mxu0 0
    %2508 = vmatpush1.bf16.msra.mxu0 %v2474
    %2509 = vmatprep.subr.bf16.mxu0 0
    %2510 = vmatpush1.bf16.msra.mxu0 %v2475
    %2511 = vmatprep.subr.bf16.mxu0 0
    %2512 = vmatpush1.bf16.msra.mxu0 %v2476
    %2513 = vmatprep.subr.bf16.mxu0 0
    %2514 = vmatpush1.bf16.msra.mxu0 %v2477
    %2515 = vmatprep.subr.bf16.mxu0 0
    %2516 = vmatpush1.bf16.msra.mxu0 %v2478
    %2517 = vmatprep.subr.bf16.mxu0 0
    %2518 = vmatpush1.bf16.msra.mxu0 %v2479
    %2519 = vmatprep.subr.bf16.mxu0 0
    %2520 = vmatpush1.bf16.msra.mxu0 %v2480
    %2521 = vmatprep.subr.bf16.mxu0 0
    %2522 = vmatpush1.bf16.msra.mxu0 %v2481
    %2523 = vmatprep.subr.bf16.mxu0 0
    %2524 = vmatpush1.bf16.msra.mxu0 %v2482
    %2525 = vmatprep.subr.bf16.mxu0 0
    %2526 = vmatpush1.bf16.msra.mxu0 %v2483
    %2527 = vmatprep.subr.bf16.mxu0 0
    %2528 = vmatpush1.bf16.msra.mxu0 %v2484
    %2529 = vmatprep.subr.bf16.mxu0 0
    %2530 = vmatpush1.bf16.msra.mxu0 %v2485
    %2531 = vmatprep.subr.bf16.mxu0 0
    %2532 = vmatpush1.bf16.msra.mxu0 %v2486
    %2533 = vmatprep.subr.bf16.mxu0 0
    %2534 = vmatpush1.bf16.msra.mxu0 %v2487
    %2535 = vmatprep.subr.bf16.mxu0 0
    %2536 = vmatpush1.bf16.msra.mxu0 %v2488
    %2537 = vmatprep.mubr.bf16.mxu0 %v2342
    %2538 = vmatmul.mubr.bf16.gmra.mrb[0].mxu0 %v2341
    %v2539 = vpop.f32.mrb[0].mxu0
    %v2540 = vadd.f32 %v2408, %v2539
    %v2541 = vpop.f32.mrb[0].mxu0
    %v2542 = vpop.f32.mrb[0].mxu0
    %v2543 = vadd.f32 %v2408, %v2542
    %v2544 = vpop.f32.mrb[0].mxu0
    %2545 = vmatprep.mubr.bf16.mxu0 %v2344
    %2546 = vmatmul.mubr.bf16.gmra.mrb[0].mxu0 %v2343
    %v2547 = vpop.f32.mrb[0].mxu0
    %v2548 = vadd.f32 %v2408, %v2547
    %v2549 = vpop.f32.mrb[0].mxu0
    %v2550 = vpop.f32.mrb[0].mxu0
    %v2551 = vadd.f32 %v2408, %v2550
    %v2552 = vpop.f32.mrb[0].mxu0
    %2553 = vmatprep.mubr.bf16.mxu0 %v2346
    %2554 = vmatmul.mubr.bf16.gmra.mrb[0].mxu0 %v2345
    %v2555 = vpop.f32.mrb[0].mxu0
    %v2556 = vadd.f32 %v2408, %v2555
    %v2557 = vpop.f32.mrb[0].mxu0
    %v2558 = vpop.f32.mrb[0].mxu0
    %v2559 = vadd.f32 %v2408, %v2558
    %v2560 = vpop.f32.mrb[0].mxu0
    %2561 = vmatprep.mubr.bf16.mxu0 %v2348
    %2562 = vmatmul.mubr.bf16.gmra.mrb[0].mxu0 %v2347
    %v2563 = vpop.f32.mrb[0].mxu0
    %v2564 = vadd.f32 %v2408, %v2563
    %v2565 = vpop.f32.mrb[0].mxu0
    %v2566 = vpop.f32.mrb[0].mxu0
    %v2567 = vadd.f32 %v2408, %v2566
    %v2568 = vpop.f32.mrb[0].mxu0
    %2569 = vmatprep.mubr.bf16.mxu0 %v2350
    %2570 = vmatmul.mubr.bf16.gmra.mrb[0].mxu0 %v2349
    %v2571 = vpop.f32.mrb[0].mxu0
    %v2572 = vadd.f32 %v2408, %v2571
    %v2573 = vpop.f32.mrb[0].mxu0
    %v2574 = vpop.f32.mrb[0].mxu0
    %v2575 = vadd.f32 %v2408, %v2574
    %v2576 = vpop.f32.mrb[0].mxu0
    %2577 = vmatprep.mubr.bf16.mxu0 %v2352
    %2578 = vmatmul.mubr.bf16.gmra.mrb[0].mxu0 %v2351
    %v2579 = vpop.f32.mrb[0].mxu0
    %v2580 = vadd.f32 %v2408, %v2579
    %v2581 = vpop.f32.mrb[0].mxu0
    %v2582 = vpop.f32.mrb[0].mxu0
    %v2583 = vadd.f32 %v2408, %v2582
    %v2584 = vpop.f32.mrb[0].mxu0
    %2585 = vmatprep.mubr.bf16.mxu0 %v2354
    %2586 = vmatmul.mubr.bf16.gmra.mrb[0].mxu0 %v2353
    %v2587 = vpop.f32.mrb[0].mxu0
    %v2588 = vadd.f32 %v2408, %v2587
    %v2589 = vpop.f32.mrb[0].mxu0
    %v2590 = vpop.f32.mrb[0].mxu0
    %v2591 = vadd.f32 %v2408, %v2590
    %v2592 = vpop.f32.mrb[0].mxu0
    %2593 = vmatprep.mubr.bf16.mxu0 %v2356
    %2594 = vmatmul.mubr.bf16.gmra.mrb[0].mxu0 %v2355
    %v2595 = vpop.f32.mrb[0].mxu0
    %v2596 = vadd.f32 %v2408, %v2595
    %v2597 = vpop.f32.mrb[0].mxu0
    %v2598 = vpop.f32.mrb[0].mxu0
    %v2599 = vadd.f32 %v2408, %v2598
    %v2600 = vpop.f32.mrb[0].mxu0
    %2601 = vmatprep.mubr.bf16.mxu0 %v2358
    %2602 = vmatmul.mubr.bf16.gmra.mrb[0].mxu0 %v2357
    %v2603 = vpop.f32.mrb[0].mxu0
    %v2604 = vadd.f32 %v2408, %v2603
    %v2605 = vpop.f32.mrb[0].mxu0
    %v2606 = vpop.f32.mrb[0].mxu0
    %v2607 = vadd.f32 %v2408, %v2606
    %v2608 = vpop.f32.mrb[0].mxu0
    %2609 = vmatprep.mubr.bf16.mxu0 %v2360
    %2610 = vmatmul.mubr.bf16.gmra.mrb[0].mxu0 %v2359
    %v2611 = vpop.f32.mrb[0].mxu0
    %v2612 = vadd.f32 %v2408, %v2611
    %v2613 = vpop.f32.mrb[0].mxu0
    %v2614 = vpop.f32.mrb[0].mxu0
    %v2615 = vadd.f32 %v2408, %v2614
    %v2616 = vpop.f32.mrb[0].mxu0
    %2617 = vmatprep.mubr.bf16.mxu0 %v2362
    %2618 = vmatmul.mubr.bf16.gmra.mrb[0].mxu0 %v2361
    %v2619 = vpop.f32.mrb[0].mxu0
    %v2620 = vadd.f32 %v2408, %v2619
    %v2621 = vpop.f32.mrb[0].mxu0
    %v2622 = vpop.f32.mrb[0].mxu0
    %v2623 = vadd.f32 %v2408, %v2622
    %v2624 = vpop.f32.mrb[0].mxu0
    %2625 = vmatprep.mubr.bf16.mxu0 %v2364
    %2626 = vmatmul.mubr.bf16.gmra.mrb[0].mxu0 %v2363
    %v2627 = vpop.f32.mrb[0].mxu0
    %v2628 = vadd.f32 %v2408, %v2627
    %v2629 = vpop.f32.mrb[0].mxu0
    %v2630 = vpop.f32.mrb[0].mxu0
    %v2631 = vadd.f32 %v2408, %v2630
    %v2632 = vpop.f32.mrb[0].mxu0
    %2633 = vmatprep.mubr.bf16.mxu0 %v2366
    %2634 = vmatmul.mubr.bf16.gmra.mrb[0].mxu0 %v2365
    %v2635 = vpop.f32.mrb[0].mxu0
    %v2636 = vadd.f32 %v2408, %v2635
    %v2637 = vpop.f32.mrb[0].mxu0
    %v2638 = vpop.f32.mrb[0].mxu0
    %v2639 = vadd.f32 %v2408, %v2638
    %v2640 = vpop.f32.mrb[0].mxu0
    %2641 = vmatprep.mubr.bf16.mxu0 %v2368
    %2642 = vmatmul.mubr.bf16.gmra.mrb[0].mxu0 %v2367
    %v2643 = vpop.f32.mrb[0].mxu0
    %v2644 = vadd.f32 %v2408, %v2643
    %v2645 = vpop.f32.mrb[0].mxu0
    %v2646 = vpop.f32.mrb[0].mxu0
    %v2647 = vadd.f32 %v2408, %v2646
    %v2648 = vpop.f32.mrb[0].mxu0
    %2649 = vmatprep.mubr.bf16.mxu0 %v2370
    %2650 = vmatmul.mubr.bf16.gmra.mrb[0].mxu0 %v2369
    %v2651 = vpop.f32.mrb[0].mxu0
    %v2652 = vadd.f32 %v2408, %v2651
    %v2653 = vpop.f32.mrb[0].mxu0
    %v2654 = vpop.f32.mrb[0].mxu0
    %v2655 = vadd.f32 %v2408, %v2654
    %v2656 = vpop.f32.mrb[0].mxu0
    %2657 = vmatprep.mubr.bf16.mxu0 %v2372
    %2658 = vmatmul.mubr.bf16.gmra.mrb[0].mxu0 %v2371
    %v2659 = vpop.f32.mrb[0].mxu0
    %v2660 = vadd.f32 %v2408, %v2659
    %v2661 = vpop.f32.mrb[0].mxu0
    %v2662 = vpop.f32.mrb[0].mxu0
    %v2663 = vadd.f32 %v2408, %v2662
    %v2664 = vpop.f32.mrb[0].mxu0
    %2665 = vdwg.mxu0
    %2666 = vst [vmem:[#allocation5] sm:$0xff] %v2540
    %2667 = vst [vmem:[#allocation5 + $0x8] sm:$0xff] %v2543
    %2668 = vst [vmem:[#allocation5 + $0x10] sm:$0xff] %v2548
    %2669 = vst [vmem:[#allocation5 + $0x18] sm:$0xff] %v2551
    %2670 = vst [vmem:[#allocation5 + $0x20] sm:$0xff] %v2556
    %2671 = vst [vmem:[#allocation5 + $0x28] sm:$0xff] %v2559
    %2672 = vst [vmem:[#allocation5 + $0x30] sm:$0xff] %v2564
    %2673 = vst [vmem:[#allocation5 + $0x38] sm:$0xff] %v2567
    %2674 = vst [vmem:[#allocation5 + $0x40] sm:$0xff] %v2572
    %2675 = vst [vmem:[#allocation5 + $0x48] sm:$0xff] %v2575
    %2676 = vst [vmem:[#allocation5 + $0x50] sm:$0xff] %v2580
    %2677 = vst [vmem:[#allocation5 + $0x58] sm:$0xff] %v2583
    %2678 = vst [vmem:[#allocation5 + $0x60] sm:$0xff] %v2588
    %2679 = vst [vmem:[#allocation5 + $0x68] sm:$0xff] %v2591
    %2680 = vst [vmem:[#allocation5 + $0x70] sm:$0xff] %v2596
    %2681 = vst [vmem:[#allocation5 + $0x78] sm:$0xff] %v2599
    %2682 = vst [vmem:[#allocation5 + $0x80] sm:$0xff] %v2604
    %2683 = vst [vmem:[#allocation5 + $0x88] sm:$0xff] %v2607
    %2684 = vst [vmem:[#allocation5 + $0x90] sm:$0xff] %v2612
    %2685 = vst [vmem:[#allocation5 + $0x98] sm:$0xff] %v2615
    %2686 = vst [vmem:[#allocation5 + $0xa0] sm:$0xff] %v2620
    %2687 = vst [vmem:[#allocation5 + $0xa8] sm:$0xff] %v2623
    %2688 = vst [vmem:[#allocation5 + $0xb0] sm:$0xff] %v2628
    %2689 = vst [vmem:[#allocation5 + $0xb8] sm:$0xff] %v2631
    %2690 = vst [vmem:[#allocation5 + $0xc0] sm:$0xff] %v2636
    %2691 = vst [vmem:[#allocation5 + $0xc8] sm:$0xff] %v2639
    %2692 = vst [vmem:[#allocation5 + $0xd0] sm:$0xff] %v2644
    %2693 = vst [vmem:[#allocation5 + $0xd8] sm:$0xff] %v2647
    %2694 = vst [vmem:[#allocation5 + $0xe0] sm:$0xff] %v2652
    %2695 = vst [vmem:[#allocation5 + $0xe8] sm:$0xff] %v2655
    %2696 = vst [vmem:[#allocation5 + $0xf0] sm:$0xff] %v2660
    %2697 = vst [vmem:[#allocation5 + $0xf8] sm:$0xff] %v2663
    // Predicated region
    $region26: #{network_forward_padded.1} parent=1 // pred_check
      _
    $region27: #{network_forward_padded.1} parent=1 // pred_check_branch
      %2699 = sbr.rel (0) target = $region29
    $region28: #{network_forward_padded.1} parent=1 // pred_region
      %s2701 = ssub.s32 4096, 4096
      %2702 = vsyncadd [#allocation4], %s2701
      %s2703 = sshll.u32 [#allocation5], 4
      %s2704 = int_to_ptr.vmem [resolvable:$true] %s2703
      %2709 = dma.vmem_to_hbm [thread:$0]  %s2704, 4096, %s5, [#allocation4], 128, 128, 8
    $region29: #{network_forward_padded.1} parent=1 // pred_fallthru
      _
    // Predicated region
    $region30: #{network_forward_padded.1} parent=1 // pred_check
      _
    $region31: #{network_forward_padded.1} parent=1 // pred_check_branch
      %2711 = sbr.rel (0) target = $region33
    $region32: #{network_forward_padded.1} parent=1 // pred_region
      %2712 = dma.done [#allocation4], 4096
    $region33: #{network_forward_padded.1} parent=1 // pred_fallthru
      _
    %2713 = vsyncpa [#allocation3], 1
    %2714 = vsyncpa [#allocation4], 1

</llo_original>
